<compile_context>
chip_gen: v7x
topology: tpu7x:2x2x1
jax: 0.10.0
libtpu: 0.0.40
codegen_flags: <defaults>
</compile_context>

<pallas_src>
import math

import jax
import jax.numpy as jnp
import numpy as np
from jax.experimental import pallas as pl
from jax.experimental.pallas import tpu as pltpu

# ----------------------------------------------------------------------------
# model-wide constants (synthetic RPN / ROI head)
# ----------------------------------------------------------------------------
NCLS = 3                        # foreground classes
HID = 64                        # ROI-head hidden width (logical)
HID_PAD = 128                   # padded hidden width -> fills MXU K dim (v5e)
S = 4                           # 2x2 ROI-align samples per proposal
RPN_OUT = 5                     # objectness + 4 box deltas
RPN_OUT_PAD = 16                # per-pixel pad; W(=8) * 16 = 128 -> lane-dense
ROI_OUT = (NCLS + 1) + NCLS * 4 # 16
ROI_OUT_PAD = 128               # lane-dense ROI-head output
BBOX_XFORM_CLIP = math.log(1000.0 / 16.0)


# ----------------------------------------------------------------------------
# Pallas kernels
# ----------------------------------------------------------------------------

def _rpn_kernel(fp_ref, bw_ref, b1_ref, w2_ref, b2_ref, o_ref):
    """Per-ROI fused 3x3 conv (3 banded matmuls) -> bias+ReLU -> 1x1 obj/box head."""
    hp = fp_ref.shape[1]                    # H + 2 (padded rows)
    h_rows = hp - 2
    acc = None
    for dy in range(3):                     # unrolled; W-shifts folded into bw_ref
        band = fp_ref[0, dy:dy + h_rows, :].astype(jnp.bfloat16)   # (H, (W+2)*C)
        part = jnp.dot(band, bw_ref[dy], preferred_element_type=jnp.float32)
        acc = part if acc is None else acc + part                  # (H, W*C) f32
    hidden = jnp.maximum(acc + b1_ref[...], 0.0).astype(jnp.bfloat16)
    o_ref[0] = (jnp.dot(hidden, w2_ref[...], preferred_element_type=jnp.float32)
                + b2_ref[...])                                     # (H, W*RPN_OUT_PAD)


def rpn_conv_head(fp2d, band_w1, b1_t, bd_w2, b2_t):
    n, hp, wc_pad = fp2d.shape
    h = hp - 2
    wout = bd_w2.shape[1]
    return pl.pallas_call(
        _rpn_kernel,
        out_shape=jax.ShapeDtypeStruct((n, h, wout), jnp.float32),
        grid=(n,),
        in_specs=[
            pl.BlockSpec((1, hp, wc_pad), lambda i: (i, 0, 0)),
            pl.BlockSpec(band_w1.shape, lambda i: (0, 0, 0)),
            pl.BlockSpec(b1_t.shape, lambda i: (0, 0)),
            pl.BlockSpec(bd_w2.shape, lambda i: (0, 0)),
            pl.BlockSpec(b2_t.shape, lambda i: (0, 0)),
        ],
        out_specs=pl.BlockSpec((1, h, wout), lambda i: (i, 0, 0)),
        compiler_params=pltpu.CompilerParams(dimension_semantics=("parallel",)),
    )(fp2d, band_w1, b1_t, bd_w2, b2_t)


def _roi_head_kernel(bw_ref, feat_ref, w1_ref, b1_ref, w2_ref, b2_ref, o_ref):
    """Per-ROI fused bilinear ROI-align (4 sample matmuls) + 2-layer MLP.

    hidden = relu(sum_s (W_s @ feat) @ fc_w1[s]) ; out = hidden @ fc_w2 + b2
    Accumulating per-sample avoids any in-kernel (P*S, C) -> (P, S*C) reshape.
    """
    n_samples = bw_ref.shape[1]
    acc = None
    for s in range(n_samples):              # unrolled over the 2x2 samples
        pooled = jnp.dot(bw_ref[0, s], feat_ref[0],
                         preferred_element_type=jnp.float32)        # (P, C) f32
        part = jnp.dot(pooled.astype(jnp.bfloat16), w1_ref[s],
                       preferred_element_type=jnp.float32)          # (P, HID_PAD)
        acc = part if acc is None else acc + part
    hidden = jnp.maximum(acc + b1_ref[...], 0.0).astype(jnp.bfloat16)
    o_ref[0] = (jnp.dot(hidden, w2_ref[...], preferred_element_type=jnp.float32)
                + b2_ref[...])                                      # (P, ROI_OUT_PAD)


def roi_align_mlp(bw, feat_flat, w1, b1, w2, b2):
    n, n_samples, p, hw = bw.shape
    c = feat_flat.shape[-1]
    outp = w2.shape[1]
    return pl.pallas_call(
        _roi_head_kernel,
        out_shape=jax.ShapeDtypeStruct((n, p, outp), jnp.float32),
        grid=(n,),
        in_specs=[
            pl.BlockSpec((1, n_samples, p, hw), lambda i: (i, 0, 0, 0)),
            pl.BlockSpec((1, hw, c), lambda i: (i, 0, 0)),
            pl.BlockSpec(w1.shape, lambda i: (0, 0, 0)),
            pl.BlockSpec(b1.shape, lambda i: (0, 0)),
            pl.BlockSpec(w2.shape, lambda i: (0, 0)),
            pl.BlockSpec(b2.shape, lambda i: (0, 0)),
        ],
        out_specs=pl.BlockSpec((1, p, outp), lambda i: (i, 0, 0)),
        compiler_params=pltpu.CompilerParams(dimension_semantics=("parallel",)),
    )(bw, feat_flat, w1, b1, w2, b2)


# ----------------------------------------------------------------------------
# glue helpers (plain JAX)
# ----------------------------------------------------------------------------

def decode_boxes(boxes, deltas, xmax, ymax):
    w = boxes[..., 2] - boxes[..., 0]
    h = boxes[..., 3] - boxes[..., 1]
    cx = boxes[..., 0] + 0.5 * w
    cy = boxes[..., 1] + 0.5 * h
    # torchvision-style clamp of dw/dh before exp to avoid inf boxes
    dw = jnp.minimum(deltas[..., 2], BBOX_XFORM_CLIP)
    dh = jnp.minimum(deltas[..., 3], BBOX_XFORM_CLIP)
    ncx = cx + deltas[..., 0] * w
    ncy = cy + deltas[..., 1] * h
    nw = w * jnp.exp(dw)
    nh = h * jnp.exp(dh)
    x1 = jnp.clip(ncx - 0.5 * nw, 0.0, xmax)
    y1 = jnp.clip(ncy - 0.5 * nh, 0.0, ymax)
    x2 = jnp.clip(ncx + 0.5 * nw, 0.0, xmax)
    y2 = jnp.clip(ncy + 0.5 * nh, 0.0, ymax)
    return jnp.stack([x1, y1, x2, y2], axis=-1)


def bilinear_weights(sy, sx, H, W):
    # sy, sx: (...,) sample points in feature-pixel coords (pixel centers @ i+0.5)
    # Clamp-style border handling (coincident clipped corners sum to weight 1).
    y = sy - 0.5
    x = sx - 0.5
    y0 = jnp.floor(y)
    x0 = jnp.floor(x)
    ly = jnp.clip(y - y0, 0.0, 1.0)
    lx = jnp.clip(x - x0, 0.0, 1.0)
    hy = 1.0 - ly
    hx = 1.0 - lx
    y0i = jnp.clip(y0.astype(jnp.int32), 0, H - 1)
    y1i = jnp.clip(y0i + 1, 0, H - 1)
    x0i = jnp.clip(x0.astype(jnp.int32), 0, W - 1)
    x1i = jnp.clip(x0i + 1, 0, W - 1)
    w = jnp.zeros(sy.shape + (H * W,), dtype=jnp.float32)
    for yi, xi, wt in ((y0i, x0i, hy * hx), (y0i, x1i, hy * lx),
                       (y1i, x0i, ly * hx), (y1i, x1i, ly * lx)):
        w = w + jax.nn.one_hot(yi * W + xi, H * W, dtype=jnp.float32) * wt[..., None]
    return w


# ----------------------------------------------------------------------------
# synthetic RPN / ROI-head parameters + kernel-format packing
# ----------------------------------------------------------------------------

def init_params(key, c):
    ks = jax.random.split(key, 4)
    return {
        "rpn_w1": 0.05 * jax.random.normal(ks[0], (3, 3, c, c), jnp.float32),  # 3x3 conv
        "rpn_b1": jnp.zeros((c,), jnp.float32),
        "rpn_w2": 0.05 * jax.random.normal(ks[1], (c, RPN_OUT), jnp.float32),  # 1x1 head
        "rpn_b2": jnp.zeros((RPN_OUT,), jnp.float32),
        "fc_w1": 0.05 * jax.random.normal(ks[2], (S, c, HID), jnp.float32),
        "fc_b1": jnp.zeros((HID,), jnp.float32),
        "fc_w2": 0.05 * jax.random.normal(ks[3], (HID, ROI_OUT), jnp.float32),
        "fc_b2": jnp.zeros((ROI_OUT,), jnp.float32),
    }


def prepare_kernel_params(params, w):
    """Pad / restructure the logical params into the MXU-friendly kernel format."""
    c = params["rpn_w1"].shape[2]
    assert (w * RPN_OUT_PAD) % 128 == 0, "RPN head output must be lane-dense"

    w1 = np.asarray(params["rpn_w1"], np.float32)            # (3, 3, C, C)
    # Fold the dx (W-axis) shifts of the 3x3 conv into a ((W+2)*C, W*C) banded
    # matrix per dy: the conv becomes 3 dense 2D matmuls on (H, (W+2)*C) bands.
    band = np.zeros((3, (w + 2) * c, w * c), np.float32)
    for dy in range(3):
        for dx in range(3):
            for x in range(w):
                band[dy, (x + dx) * c:(x + dx + 1) * c, x * c:(x + 1) * c] = w1[dy, dx]

    # 1x1 obj/box head as a block-diagonal (W*C, W*RPN_OUT_PAD) matrix.
    w2p = np.zeros((c, RPN_OUT_PAD), np.float32)
    w2p[:, :RPN_OUT] = np.asarray(params["rpn_w2"], np.float32)
    bdiag = np.zeros((w * c, w * RPN_OUT_PAD), np.float32)
    for x in range(w):
        bdiag[x * c:(x + 1) * c, x * RPN_OUT_PAD:(x + 1) * RPN_OUT_PAD] = w2p

    b1_t = np.tile(np.asarray(params["rpn_b1"], np.float32), w)[None, :]
    b2p = np.zeros((RPN_OUT_PAD,), np.float32)
    b2p[:RPN_OUT] = np.asarray(params["rpn_b2"], np.float32)
    b2_t = np.tile(b2p, w)[None, :]

    # ROI head: pad hidden to HID_PAD lanes and output to ROI_OUT_PAD lanes.
    fc_w1p = np.zeros((S, c, HID_PAD), np.float32)
    fc_w1p[:, :, :HID] = np.asarray(params["fc_w1"], np.float32)
    fc_b1p = np.zeros((1, HID_PAD), np.float32)
    fc_b1p[0, :HID] = np.asarray(params["fc_b1"], np.float32)
    fc_w2p = np.zeros((HID_PAD, ROI_OUT_PAD), np.float32)
    fc_w2p[:HID, :ROI_OUT] = np.asarray(params["fc_w2"], np.float32)
    fc_b2p = np.zeros((1, ROI_OUT_PAD), np.float32)
    fc_b2p[0, :ROI_OUT] = np.asarray(params["fc_b2"], np.float32)

    return {
        "rpn_band_w1": jnp.asarray(band, jnp.bfloat16),
        "rpn_b1_t": jnp.asarray(b1_t, jnp.float32),
        "rpn_bd_w2": jnp.asarray(bdiag, jnp.bfloat16),
        "rpn_b2_t": jnp.asarray(b2_t, jnp.float32),
        "fc_w1": jnp.asarray(fc_w1p, jnp.bfloat16),
        "fc_b1": jnp.asarray(fc_b1p, jnp.float32),
        "fc_w2": jnp.asarray(fc_w2p, jnp.bfloat16),
        "fc_b2": jnp.asarray(fc_b2p, jnp.float32),
    }


# ----------------------------------------------------------------------------
# RoIFasterRCNNHeads forward (eval path)
# ----------------------------------------------------------------------------

class RoIFasterRCNNHeadsPallas:
    """Eval-mode forward of RoIFasterRCNNHeads with synthetic rpn / roi_head."""

    def __init__(self, cfg, params, just_rpn=False):
        self.cfg = cfg
        self.params = params
        self.just_rpn = just_rpn
        self.kparams = prepare_kernel_params(params, cfg.roi_pool_w)
        # TODO(synk): training path (RPN + ROI losses) not implemented; inference only.

    # ---------------- RPN: 3x3 conv -> ReLU -> 1x1 obj/box head --------------
    def _rpn(self, feat_nhwc, stride):
        kp = self.kparams
        n, h, w, c = feat_nhwc.shape
        assert w == self.cfg.roi_pool_w, "kernel params were built for roi_pool_w"
        fp = jnp.pad(feat_nhwc, ((0, 0), (1, 1), (1, 1), (0, 0)))
        fp2d = fp.reshape(n, h + 2, (w + 2) * c)                     # rows x (pixel*C)
        out = rpn_conv_head(fp2d, kp["rpn_band_w1"], kp["rpn_b1_t"],
                            kp["rpn_bd_w2"], kp["rpn_b2_t"])         # (N, H, W*16) [Pallas]
        out = out.reshape(n, h * w, RPN_OUT_PAD)
        obj = out[..., 0]                                            # (N, P)
        deltas = out[..., 1:1 + 4]                                   # (N, P, 4)
        ys, xs = jnp.meshgrid(jnp.arange(h, dtype=jnp.float32),
                              jnp.arange(w, dtype=jnp.float32), indexing="ij")
        cx = (xs.reshape(-1) + 0.5) * stride
        cy = (ys.reshape(-1) + 0.5) * stride
        a = 2.0 * stride
        anchors = jnp.stack([cx - a, cy - a, cx + a, cy + a], axis=-1)  # (P, 4)
        anchors = jnp.broadcast_to(anchors, (n, h * w, 4))
        xmax = self.cfg.roi_pool_w * stride
        ymax = self.cfg.roi_pool_h * stride
        proposals = decode_boxes(anchors, deltas, xmax, ymax)        # (N, P, 4) ROI-local px
        scores = jax.nn.sigmoid(obj)                                 # (N, P)
        # TODO(synk): top-k / NMS proposal filtering (dynamic sizes) omitted; keep all.
        return proposals, scores

    # ---------------- ROI head: fused ROI-align + 2-layer MLP ----------------
    def _roi_head(self, proposals, feat_nhwc, stride):
        kp = self.kparams
        n, h, w, c = feat_nhwc.shape
        p = proposals.shape[1]
        x1, y1 = proposals[..., 0], proposals[..., 1]
        x2, y2 = proposals[..., 2], proposals[..., 3]
        bw_box = jnp.maximum(x2 - x1, 1e-3)
        bh_box = jnp.maximum(y2 - y1, 1e-3)
        fr = jnp.array([0.25, 0.75], dtype=jnp.float32)
        sx = x1[..., None, None] + bw_box[..., None, None] * fr[None, None, None, :]
        sy = y1[..., None, None] + bh_box[..., None, None] * fr[None, None, :, None]
        sx = jnp.broadcast_to(sx, (n, p, 2, 2)).reshape(n, p, S) / stride
        sy = jnp.broadcast_to(sy, (n, p, 2, 2)).reshape(n, p, S) / stride
        sx = jnp.transpose(sx, (0, 2, 1))                            # (N, S, P)
        sy = jnp.transpose(sy, (0, 2, 1))
        # TODO(synk): dense (N,S,P,HW) bilinear weights are fine at HW=64; switch to a
        # scalar-prefetched gather formulation for large feature maps.
        weights = bilinear_weights(sy, sx, h, w).astype(jnp.bfloat16)  # (N, S, P, HW)
        feat_flat = feat_nhwc.reshape(n, h * w, c).astype(jnp.bfloat16)
        out = roi_align_mlp(weights, feat_flat, kp["fc_w1"], kp["fc_b1"],
                            kp["fc_w2"], kp["fc_b2"])                  # (N, P, 128) [Pallas]
        out = out.reshape(n * p, ROI_OUT_PAD)
        cls_logits = out[:, :NCLS + 1]
        reg = out[:, NCLS + 1:NCLS + 1 + NCLS * 4].reshape(n * p, NCLS, 4)
        probs = jax.nn.softmax(cls_logits, axis=-1)
        fg = probs[:, 1:]
        labels0 = jnp.argmax(fg, axis=-1)                             # 0..NCLS-1
        scores = jnp.max(fg, axis=-1)
        reg_sel = reg[jnp.arange(n * p), labels0]                     # (N*P, 4)
        xmax = self.cfg.roi_pool_w * stride
        ymax = self.cfg.roi_pool_h * stride
        boxes = decode_boxes(proposals.reshape(n * p, 4), reg_sel, xmax, ymax)
        boxes = boxes.reshape(n, p, 4)
        labels = (labels0 + 1).astype(jnp.int32).reshape(n, p)
        scores = scores.reshape(n, p)
        return {
            "boxes": [boxes[i] for i in range(n)],
            "labels": [labels[i] for i in range(n)],
            "scores": [scores[i] for i in range(n)],
        }

    # ---------------- post_process (module's own compute, plain jnp) ---------
    def post_process(self, results, human_boxes_batch, stride):
        roi_per_im = [int(b.shape[0]) for b in human_boxes_batch]
        roi_boxes = jnp.concatenate(human_boxes_batch, axis=0)          # (N, 4)
        w_scale = (roi_boxes[:, 2] - roi_boxes[:, 0]) / self.cfg.roi_pool_w / stride
        h_scale = (roi_boxes[:, 3] - roi_boxes[:, 1]) / self.cfg.roi_pool_h / stride
        scale = jnp.stack([w_scale, h_scale, w_scale, h_scale], axis=1)  # (N, 4)
        offset = jnp.stack([roi_boxes[:, 0], roi_boxes[:, 1],
                            roi_boxes[:, 0], roi_boxes[:, 1]], axis=1)   # (N, 4)
        boxes_all = jnp.stack(results["boxes"], axis=0)                  # (N, P, 4)
        # elementwise rescale in plain jnp so XLA fuses it with the box decode
        boxes_all = boxes_all * scale[:, None, :] + offset[:, None, :]
        out_boxes, out_labels, out_scores = [], [], []
        ind = 0
        for num in roi_per_im:
            out_boxes.append(boxes_all[ind:ind + num].reshape(-1, 4))
            out_labels.append(jnp.concatenate(results["labels"][ind:ind + num], axis=0))
            out_scores.append(jnp.concatenate(results["scores"][ind:ind + num], axis=0))
            ind += num
        return {"boxes": out_boxes, "labels": out_labels, "scores": out_scores}

    # ---------------- forward (eval branch of the PyTorch module) ------------
    def __call__(self, roi_boxes, features, stride, inputs, targets=None):
        # features: NCHW (PyTorch convention) -> NHWC for the kernels
        feat = jnp.transpose(features, (0, 2, 3, 1)).astype(jnp.float32)
        proposals, scores = self._rpn(feat, stride)
        if self.just_rpn:
            n = proposals.shape[0]
            results = {
                "boxes": [proposals[i] for i in range(n)],
                "scores": [scores[i] for i in range(n)],
                # mirrors the reference: labels = ones_like(scores) (float32)
                "labels": [jnp.ones_like(scores[i]) for i in range(n)],
            }
            return self.post_process(results, roi_boxes, stride)
        results = self._roi_head(proposals, feat, stride)
        return self.post_process(results, roi_boxes, stride)


# ----------------------------------------------------------------------------
# main
# ----------------------------------------------------------------------------

if __name__ == "__main__":
    class Cfg:
        roi_pool_w = 8
        roi_pool_h = 8

    cfg = Cfg()
    C, Hf, Wf = 32, 8, 8          # ROI feature maps: 8x8, 32 channels
    stride = 4.0                  # feature stride -> ROI-local frame is 32x32 px
    N_total_rois = 4              # 2 images x 2 human ROIs each

    key = jax.random.PRNGKey(0)
    k_feat, k_params = jax.random.split(key)
    params = init_params(k_params, C)

    # PyTorch-style NCHW per-ROI feature maps
    features = jax.random.normal(k_feat, (N_total_rois, C, Hf, Wf), dtype=jnp.float32)
    # human ROI boxes (x1, y1, x2, y2) in image coordinates, per image
    roi_boxes = [
        jnp.array([[10.0, 20.0, 74.0, 100.0],
                   [50.0, 30.0, 110.0, 120.0]], dtype=jnp.float32),
        jnp.array([[5.0, 5.0, 69.0, 69.0],
                   [30.0, 40.0, 94.0, 126.0]], dtype=jnp.float32),
    ]
    inputs = {"data": jnp.zeros((2, 3, 128, 128), dtype=jnp.float32)}

    model = RoIFasterRCNNHeadsPallas(cfg, params, just_rpn=False)
    results = model(roi_boxes, features, stride, inputs, targets=None)
    jax.block_until_ready(results)

    # light sanity checks on shapes
    assert len(results["boxes"]) == 2
    assert results["boxes"][0].shape == (2 * Hf * Wf, 4)
    assert results["scores"][0].shape == (2 * Hf * Wf,)
    assert results["labels"][0].shape == (2 * Hf * Wf,)
    print("KERNEL_OK")
</pallas_src>

<mosaic_0001>
module attributes {stable_mosaic.version = 11 : i64} {
  func.func @_rpn_kernel(%arg0: i32, %arg1: memref<1x10x320xf32, #tpu.memory_space<vmem>>, %arg2: memref<3x320x256xbf16, #tpu.memory_space<vmem>>, %arg3: memref<1x256xf32, #tpu.memory_space<vmem>>, %arg4: memref<256x128xbf16, #tpu.memory_space<vmem>>, %arg5: memref<1x128xf32, #tpu.memory_space<vmem>>, %arg6: memref<1x8x128xf32, #tpu.memory_space<vmem>>) attributes {dimension_semantics = [#tpu.dimension_semantics<parallel>], iteration_bounds = array<i64: 4>, scalar_prefetch = 0 : i64, scratch_operands = 0 : i64, tpu.core_type = #tpu.core_type<tc>, window_params = [{transform_indices = @transform_0, window_bounds = array<i64: 1, 10, 320>}, {pipeline_mode = #tpu.pipeline_mode<synchronous>, transform_indices = @transform_1, window_bounds = array<i64: 3, 320, 256>}, {pipeline_mode = #tpu.pipeline_mode<synchronous>, transform_indices = @transform_2, window_bounds = array<i64: 1, 256>}, {pipeline_mode = #tpu.pipeline_mode<synchronous>, transform_indices = @transform_3, window_bounds = array<i64: 256, 128>}, {pipeline_mode = #tpu.pipeline_mode<synchronous>, transform_indices = @transform_4, window_bounds = array<i64: 1, 128>}, {transform_indices = @transform_5, window_bounds = array<i64: 1, 8, 128>}]} {
    %c0 = arith.constant 0 : index
    %c0_0 = arith.constant 0 : index
    %c0_1 = arith.constant 0 : index
    %0 = vector.load %arg1[%c0, %c0_0, %c0_1] : memref<1x10x320xf32, #tpu.memory_space<vmem>>, vector<1x8x320xf32>
    %1 = vector.shape_cast %0 : vector<1x8x320xf32> to vector<8x320xf32>
    %2 = arith.truncf %1 : vector<8x320xf32> to vector<8x320xbf16>
    %c0_2 = arith.constant 0 : index
    %c0_3 = arith.constant 0 : index
    %c0_4 = arith.constant 0 : index
    %3 = vector.load %arg2[%c0_2, %c0_3, %c0_4] : memref<3x320x256xbf16, #tpu.memory_space<vmem>>, vector<1x320x256xbf16>
    %4 = vector.shape_cast %3 : vector<1x320x256xbf16> to vector<320x256xbf16>
    %cst = arith.constant dense<0.000000e+00> : vector<8x256xf32>
    %5 = tpu.matmul %2, %4, %cst {dimension_numbers = #tpu.dot_dimension_numbers<[1], [0], [0], [1], [0, 0, 1, 1], [], []>} : vector<8x320xbf16>, vector<320x256xbf16>, vector<8x256xf32> -> vector<8x256xf32>
    %c0_5 = arith.constant 0 : index
    %c1 = arith.constant 1 : index
    %c0_6 = arith.constant 0 : index
    %6 = vector.load %arg1[%c0_5, %c1, %c0_6] : memref<1x10x320xf32, #tpu.memory_space<vmem>>, vector<1x8x320xf32>
    %7 = vector.shape_cast %6 : vector<1x8x320xf32> to vector<8x320xf32>
    %8 = arith.truncf %7 : vector<8x320xf32> to vector<8x320xbf16>
    %c1_7 = arith.constant 1 : index
    %c0_8 = arith.constant 0 : index
    %c0_9 = arith.constant 0 : index
    %9 = vector.load %arg2[%c1_7, %c0_8, %c0_9] : memref<3x320x256xbf16, #tpu.memory_space<vmem>>, vector<1x320x256xbf16>
    %10 = vector.shape_cast %9 : vector<1x320x256xbf16> to vector<320x256xbf16>
    %cst_10 = arith.constant dense<0.000000e+00> : vector<8x256xf32>
    %11 = tpu.matmul %8, %10, %cst_10 {dimension_numbers = #tpu.dot_dimension_numbers<[1], [0], [0], [1], [0, 0, 1, 1], [], []>} : vector<8x320xbf16>, vector<320x256xbf16>, vector<8x256xf32> -> vector<8x256xf32>
    %12 = arith.addf %5, %11 : vector<8x256xf32>
    %c0_11 = arith.constant 0 : index
    %c2 = arith.constant 2 : index
    %c0_12 = arith.constant 0 : index
    %13 = vector.load %arg1[%c0_11, %c2, %c0_12] : memref<1x10x320xf32, #tpu.memory_space<vmem>>, vector<1x8x320xf32>
    %14 = vector.shape_cast %13 : vector<1x8x320xf32> to vector<8x320xf32>
    %15 = arith.truncf %14 : vector<8x320xf32> to vector<8x320xbf16>
    %c2_13 = arith.constant 2 : index
    %c0_14 = arith.constant 0 : index
    %c0_15 = arith.constant 0 : index
    %16 = vector.load %arg2[%c2_13, %c0_14, %c0_15] : memref<3x320x256xbf16, #tpu.memory_space<vmem>>, vector<1x320x256xbf16>
    %17 = vector.shape_cast %16 : vector<1x320x256xbf16> to vector<320x256xbf16>
    %cst_16 = arith.constant dense<0.000000e+00> : vector<8x256xf32>
    %18 = tpu.matmul %15, %17, %cst_16 {dimension_numbers = #tpu.dot_dimension_numbers<[1], [0], [0], [1], [0, 0, 1, 1], [], []>} : vector<8x320xbf16>, vector<320x256xbf16>, vector<8x256xf32> -> vector<8x256xf32>
    %19 = arith.addf %12, %18 : vector<8x256xf32>
    %c0_17 = arith.constant 0 : index
    %c0_18 = arith.constant 0 : index
    %20 = vector.load %arg3[%c0_17, %c0_18] : memref<1x256xf32, #tpu.memory_space<vmem>>, vector<1x256xf32>
    %21 = vector.broadcast %20 : vector<1x256xf32> to vector<8x256xf32>
    %22 = arith.addf %19, %21 : vector<8x256xf32>
    %cst_19 = arith.constant 0.000000e+00 : f32
    %23 = vector.broadcast %cst_19 : f32 to vector<8x256xf32>
    %24 = arith.maximumf %22, %23 : vector<8x256xf32>
    %25 = arith.truncf %24 : vector<8x256xf32> to vector<8x256xbf16>
    %c0_20 = arith.constant 0 : index
    %c0_21 = arith.constant 0 : index
    %26 = vector.load %arg4[%c0_20, %c0_21] : memref<256x128xbf16, #tpu.memory_space<vmem>>, vector<256x128xbf16>
    %cst_22 = arith.constant dense<0.000000e+00> : vector<8x128xf32>
    %27 = tpu.matmul %25, %26, %cst_22 {dimension_numbers = #tpu.dot_dimension_numbers<[1], [0], [0], [1], [0, 0, 1, 1], [], []>} : vector<8x256xbf16>, vector<256x128xbf16>, vector<8x128xf32> -> vector<8x128xf32>
    %c0_23 = arith.constant 0 : index
    %c0_24 = arith.constant 0 : index
    %28 = vector.load %arg5[%c0_23, %c0_24] : memref<1x128xf32, #tpu.memory_space<vmem>>, vector<1x128xf32>
    %29 = vector.broadcast %28 : vector<1x128xf32> to vector<8x128xf32>
    %30 = arith.addf %27, %29 : vector<8x128xf32>
    %c0_25 = arith.constant 0 : index
    %c0_26 = arith.constant 0 : index
    %c0_27 = arith.constant 0 : index
    %31 = vector.load %arg6[%c0_25, %c0_26, %c0_27] : memref<1x8x128xf32, #tpu.memory_space<vmem>>, vector<1x8x128xf32>
    %32 = vector.shape_cast %31 : vector<1x8x128xf32> to vector<8x128xf32>
    %33 = vector.shape_cast %30 : vector<8x128xf32> to vector<1x8x128xf32>
    tpu.vector_store %arg6[%c0_25, %c0_26, %c0_27], %33 {strides = array<i32>} : memref<1x8x128xf32, #tpu.memory_space<vmem>>, vector<1x8x128xf32>,
    return
  }
  func.func @transform_0(%arg0: i32) -> (i32, i32, i32) {
    %c0_i32 = arith.constant 0 : i32
    %c0_i32_0 = arith.constant 0 : i32
    %c0_i32_1 = arith.constant 0 : i32
    return %arg0, %c0_i32, %c0_i32_0 : i32, i32, i32
  }
  func.func @transform_1(%arg0: i32) -> (i32, i32, i32) {
    %c0_i32 = arith.constant 0 : i32
    %c0_i32_0 = arith.constant 0 : i32
    %c0_i32_1 = arith.constant 0 : i32
    %c0_i32_2 = arith.constant 0 : i32
    return %c0_i32, %c0_i32_0, %c0_i32_1 : i32, i32, i32
  }
  func.func @transform_2(%arg0: i32) -> (i32, i32) {
    %c0_i32 = arith.constant 0 : i32
    %c0_i32_0 = arith.constant 0 : i32
    %c0_i32_1 = arith.constant 0 : i32
    return %c0_i32, %c0_i32_0 : i32, i32
  }
  func.func @transform_3(%arg0: i32) -> (i32, i32) {
    %c0_i32 = arith.constant 0 : i32
    %c0_i32_0 = arith.constant 0 : i32
    %c0_i32_1 = arith.constant 0 : i32
    return %c0_i32, %c0_i32_0 : i32, i32
  }
  func.func @transform_4(%arg0: i32) -> (i32, i32) {
    %c0_i32 = arith.constant 0 : i32
    %c0_i32_0 = arith.constant 0 : i32
    %c0_i32_1 = arith.constant 0 : i32
    return %c0_i32, %c0_i32_0 : i32, i32
  }
  func.func @transform_5(%arg0: i32) -> (i32, i32, i32) {
    %c0_i32 = arith.constant 0 : i32
    %c0_i32_0 = arith.constant 0 : i32
    %c0_i32_1 = arith.constant 0 : i32
    return %arg0, %c0_i32, %c0_i32_0 : i32, i32, i32
  }
}

</mosaic_0001>

<llo_original>
// kernel: tpu_custom_call.1
$region0: #{tpu_custom_call.1}
  #allocation0 [shape = 'u32[]', space=smem, size = 0x4, offset = 0x4, fixed_abs, tag = 'smem constant byte address 0x4 - core index']
  #allocation1 [shape = 'u32[144,128]{1,0:T(1,128)}', space=vmem, size = 0x12000, scoped, tag = 'internal scratch']
  %s0 = inlined_call_operand.vmem [shape: f32[4,10,320], index: 0, kind: input, shape index: {}]
  %s1 = inlined_call_operand.hbm [shape: bf16[3,320,256], index: 1, kind: input, shape index: {}]
  %s2 = inlined_call_operand.vmem [shape: f32[1,256], index: 2, kind: input, shape index: {}]
  %s3 = inlined_call_operand.vmem [shape: bf16[256,128], index: 3, kind: input, shape index: {}]
  %s4 = inlined_call_operand.vmem [shape: f32[1,128], index: 4, kind: input, shape index: {}]
  %s5 = inlined_call_operand.hbm [shape: f32[4,8,128], index: 5, kind: output, shape index: {}]
  %s6 = sld [smem:[#allocation0]]
  $region57: #{tpu_custom_call.1} parent=0
    _
  %s8 = ssub.s32 1, %s6
  %s9 = scalar_select 0, %s8, %s6
  $region1: #{tpu_custom_call.1} parent=0
    #allocation2 [shape = 'u8[491520]{0}', space=vmem, size = 0x78000, scoped, tag = 'input window, operand 1, single buffered']
    #allocation3 [shape = 's32[2]{0}', space=sflag, size = 0x8, scoped, tag = 'scoped memory for tpu_custom_call.1']
    #allocation4 [shape = 's32[2]{0}', space=sflag, size = 0x8, scoped, tag = 'scoped memory for tpu_custom_call.1']
    #allocation5 [shape = 'u8[8192]{0}', space=vmem, size = 0x2000, scoped, tag = 'output window, operand 0']
    %10 = vsyncpa [#allocation3], 0
    %11 = vsyncpa [#allocation4], 0
    %s12 = scalar_lea.sflag [#allocation4], 1
    %13 = vsyncpa %s12, 0
    loop: start=0, step=1, limit=6
    $region2: #{tpu_custom_call.1} parent=1 // loop_pre_header
      _
    $region3: #{tpu_custom_call.1} parent=1 // loop_header
      %s15 = sphi 0, %s19
      %p16 = scmp.ge.s32.totalorder %s15, 6
      %s25 = sphi 0, %s27
      %s28 = sphi 0, %s25
      %s29 = sphi 0, %s28
      %s45 = sphi 0, %s29
      %s49 = sphi 0, %s49
      %s51 = sphi 0, %s49
      %s52 = sphi 0, %s51
      %s66 = sphi 0, %s52
      %s70 = sphi 0, %s70
      %s72 = sphi 0, %s70
      %s73 = sphi 0, %s72
      %s87 = sphi 0, %s73
      %s91 = sphi 0, %s91
      %s93 = sphi 0, %s91
      %s94 = sphi 0, %s93
      %s108 = sphi 0, %s94
      %s112 = sphi 0, %s112
      %s114 = sphi 0, %s112
      %s115 = sphi 0, %s114
      %s129 = sphi 0, %s115
      %s135 = sphi 0, %s137
      %s138 = sphi 0, %s135
      %s139 = sphi 0, %s138
      %s155 = sphi 0, %s139
    $region4: #{tpu_custom_call.1} parent=1 // loop_header_branch
      %18 = sbr.rel (%p16) target = $region8
    $region5: #{tpu_custom_call.1} parent=1 // loop_body
      %s20 = ssub.s32 %s15, 1
      %s21 = ssub.s32 %s15, 2
      %s22 = sadd.s32 %s15, 1
      %s23 = ssub.s32 %s15, %s22
      %p24 = scmp.eq.s32.totalorder %s23, 0
      %s26 = sadd.s32 %s25, 1
      %s27 = scalar_select %p24, %s25, %s26
      %p30 = pneg %p24
      %p31 = scmp.eq.s32.totalorder %s15, 3
      %p32 = por %p30, %p31
      %p33 = scmp.ne.s32.totalorder %s25, %s28
      %p34 = scmp.eq.s32.totalorder %s15, 0
      %p35 = por %p33, %p34
      %p36 = scmp.ne.s32.totalorder %s25, %s28
      %p37 = scmp.eq.s32.totalorder %s20, 3
      %p38 = por %p36, %p37
      %p39 = scmp.ne.s32.totalorder %s28, %s29
      %p40 = scmp.eq.s32.totalorder %s20, 0
      %p41 = por %p39, %p40
      %p42 = scmp.ne.s32.totalorder %s28, %s29
      %p43 = scmp.eq.s32.totalorder %s21, 3
      %p44 = por %p42, %p43
      %p46 = scmp.ne.s32.totalorder %s29, %s45
      %p47 = scmp.eq.s32.totalorder %s21, 0
      %p48 = por %p46, %p47
      %s50 = sadd.s32 %s49, 1
      %p53 = scmp.eq.s32.totalorder %s15, 3
      %p54 = scmp.ne.s32.totalorder %s49, %s51
      %p55 = scmp.eq.s32.totalorder %s15, 0
      %p56 = por %p54, %p55
      %p57 = scmp.ne.s32.totalorder %s49, %s51
      %p58 = scmp.eq.s32.totalorder %s20, 3
      %p59 = por %p57, %p58
      %p60 = scmp.ne.s32.totalorder %s51, %s52
      %p61 = scmp.eq.s32.totalorder %s20, 0
      %p62 = por %p60, %p61
      %p63 = scmp.ne.s32.totalorder %s51, %s52
      %p64 = scmp.eq.s32.totalorder %s21, 3
      %p65 = por %p63, %p64
      %p67 = scmp.ne.s32.totalorder %s52, %s66
      %p68 = scmp.eq.s32.totalorder %s21, 0
      %p69 = por %p67, %p68
      %s71 = sadd.s32 %s70, 1
      %p74 = scmp.eq.s32.totalorder %s15, 3
      %p75 = scmp.ne.s32.totalorder %s70, %s72
      %p76 = scmp.eq.s32.totalorder %s15, 0
      %p77 = por %p75, %p76
      %p78 = scmp.ne.s32.totalorder %s70, %s72
      %p79 = scmp.eq.s32.totalorder %s20, 3
      %p80 = por %p78, %p79
      %p81 = scmp.ne.s32.totalorder %s72, %s73
      %p82 = scmp.eq.s32.totalorder %s20, 0
      %p83 = por %p81, %p82
      %p84 = scmp.ne.s32.totalorder %s72, %s73
      %p85 = scmp.eq.s32.totalorder %s21, 3
      %p86 = por %p84, %p85
      %p88 = scmp.ne.s32.totalorder %s73, %s87
      %p89 = scmp.eq.s32.totalorder %s21, 0
      %p90 = por %p88, %p89
      %s92 = sadd.s32 %s91, 1
      %p95 = scmp.eq.s32.totalorder %s15, 3
      %p96 = scmp.ne.s32.totalorder %s91, %s93
      %p97 = scmp.eq.s32.totalorder %s15, 0
      %p98 = por %p96, %p97
      %p99 = scmp.ne.s32.totalorder %s91, %s93
      %p100 = scmp.eq.s32.totalorder %s20, 3
      %p101 = por %p99, %p100
      %p102 = scmp.ne.s32.totalorder %s93, %s94
      %p103 = scmp.eq.s32.totalorder %s20, 0
      %p104 = por %p102, %p103
      %p105 = scmp.ne.s32.totalorder %s93, %s94
      %p106 = scmp.eq.s32.totalorder %s21, 3
      %p107 = por %p105, %p106
      %p109 = scmp.ne.s32.totalorder %s94, %s108
      %p110 = scmp.eq.s32.totalorder %s21, 0
      %p111 = por %p109, %p110
      %s113 = sadd.s32 %s112, 1
      %p116 = scmp.eq.s32.totalorder %s15, 3
      %p117 = scmp.ne.s32.totalorder %s112, %s114
      %p118 = scmp.eq.s32.totalorder %s15, 0
      %p119 = por %p117, %p118
      %p120 = scmp.ne.s32.totalorder %s112, %s114
      %p121 = scmp.eq.s32.totalorder %s20, 3
      %p122 = por %p120, %p121
      %p123 = scmp.ne.s32.totalorder %s114, %s115
      %p124 = scmp.eq.s32.totalorder %s20, 0
      %p125 = por %p123, %p124
      %p126 = scmp.ne.s32.totalorder %s114, %s115
      %p127 = scmp.eq.s32.totalorder %s21, 3
      %p128 = por %p126, %p127
      %p130 = scmp.ne.s32.totalorder %s115, %s129
      %p131 = scmp.eq.s32.totalorder %s21, 0
      %p132 = por %p130, %p131
      %s133 = ssub.s32 %s15, %s22
      %p134 = scmp.eq.s32.totalorder %s133, 0
      %s136 = sadd.s32 %s135, 1
      %s137 = scalar_select %p134, %s135, %s136
      %p140 = pneg %p134
      %p141 = scmp.eq.s32.totalorder %s15, 3
      %p142 = por %p140, %p141
      %p143 = scmp.ne.s32.totalorder %s135, %s138
      %p144 = scmp.eq.s32.totalorder %s15, 0
      %p145 = por %p143, %p144
      %p146 = scmp.ne.s32.totalorder %s135, %s138
      %p147 = scmp.eq.s32.totalorder %s20, 3
      %p148 = por %p146, %p147
      %p149 = scmp.ne.s32.totalorder %s138, %s139
      %p150 = scmp.eq.s32.totalorder %s20, 0
      %p151 = por %p149, %p150
      %p152 = scmp.ne.s32.totalorder %s138, %s139
      %p153 = scmp.eq.s32.totalorder %s21, 3
      %p154 = por %p152, %p153
      %p156 = scmp.ne.s32.totalorder %s139, %s155
      %p157 = scmp.eq.s32.totalorder %s21, 0
      %p158 = por %p156, %p157
      %p159 = scmp.le.s32.totalorder 1, %s15
      %p160 = scmp.lt.s32.totalorder %s15, 5
      %p161 = pnand %p159, %p160
      %p162 = pneg %p161
      // Predicated region
      $region9: #{tpu_custom_call.1} parent=5 // pred_check
        _
      $region10: #{tpu_custom_call.1} parent=5 // pred_check_branch
        %164 = sbr.rel (%p161) target = $region12
      $region11: #{tpu_custom_call.1} parent=5 // pred_region
        %s165 = ssub.s32 %s15, 1
        // Predicated region
        $region13: #{tpu_custom_call.1} parent=11 // pred_check
          %p166 = pneg %p62
        $region14: #{tpu_custom_call.1} parent=11 // pred_check_branch
          %168 = sbr.rel (%p166) target = $region16
        $region15: #{tpu_custom_call.1} parent=11 // pred_region
          %s170 = ssub.s32 15360, 15360
          %171 = vsyncadd [#allocation3], %s170
          %s172 = sshll.u32 [#allocation2], 4
          %s173 = int_to_ptr.vmem [resolvable:$true] %s172
          %178 = dma.hbm_to_vmem [thread:$0]  %s1, 15360, %s173, [#allocation3], 128, 128, 8
        $region16: #{tpu_custom_call.1} parent=11 // pred_fallthru
          _
        // Predicated region
        $region17: #{tpu_custom_call.1} parent=11 // pred_check
          %p179 = pneg %p83
        $region18: #{tpu_custom_call.1} parent=11 // pred_check_branch
          %181 = sbr.rel (%p179) target = $region20
        $region19: #{tpu_custom_call.1} parent=11 // pred_region
          _
        $region20: #{tpu_custom_call.1} parent=11 // pred_fallthru
          _
        // Predicated region
        $region21: #{tpu_custom_call.1} parent=11 // pred_check
          %p182 = pneg %p104
        $region22: #{tpu_custom_call.1} parent=11 // pred_check_branch
          %184 = sbr.rel (%p182) target = $region24
        $region23: #{tpu_custom_call.1} parent=11 // pred_region
          _
        $region24: #{tpu_custom_call.1} parent=11 // pred_fallthru
          _
        // Predicated region
        $region25: #{tpu_custom_call.1} parent=11 // pred_check
          %p185 = pneg %p125
        $region26: #{tpu_custom_call.1} parent=11 // pred_check_branch
          %187 = sbr.rel (%p185) target = $region28
        $region27: #{tpu_custom_call.1} parent=11 // pred_region
          _
        $region28: #{tpu_custom_call.1} parent=11 // pred_fallthru
          _
      $region12: #{tpu_custom_call.1} parent=5 // pred_fallthru
        _
      %p188 = scmp.lt.s32.totalorder %s15, 4
      // Predicated region
      $region29: #{tpu_custom_call.1} parent=5 // pred_check
        %p189 = pneg %p188
      $region30: #{tpu_custom_call.1} parent=5 // pred_check_branch
        %191 = sbr.rel (%p189) target = $region32
      $region31: #{tpu_custom_call.1} parent=5 // pred_region
        // Predicated region
        $region33: #{tpu_custom_call.1} parent=31 // pred_check
          %p192 = pneg %p35
        $region34: #{tpu_custom_call.1} parent=31 // pred_check_branch
          %194 = sbr.rel (%p192) target = $region36
        $region35: #{tpu_custom_call.1} parent=31 // pred_region
          %p195 = scmp.lt.s32.totalorder %s15, 3
          %s196 = scalar_select %p195, %s15, 3
          %s197 = smul.addr %s196, 6
          %s198 = smul.addr %s197, 8
          %s199 = scalar_lea.vmem %s0, %s198
        $region36: #{tpu_custom_call.1} parent=31 // pred_fallthru
          _
      $region32: #{tpu_custom_call.1} parent=5 // pred_fallthru
        _
      %p200 = scmp.le.s32.totalorder 1, %s15
      %p201 = scmp.lt.s32.totalorder %s15, 5
      %p202 = pnand %p200, %p201
      %p203 = pneg %p202
      // Predicated region
      $region37: #{tpu_custom_call.1} parent=5 // pred_check
        _
      $region38: #{tpu_custom_call.1} parent=5 // pred_check_branch
        %205 = sbr.rel (%p202) target = $region40
      $region39: #{tpu_custom_call.1} parent=5 // pred_region
        %s206 = ssub.s32 %s15, 1
        // Predicated region
        $region41: #{tpu_custom_call.1} parent=39 // pred_check
          %p207 = pneg %p62
        $region42: #{tpu_custom_call.1} parent=39 // pred_check_branch
          %209 = sbr.rel (%p207) target = $region44
        $region43: #{tpu_custom_call.1} parent=39 // pred_region
          %210 = dma.done [#allocation3], 15360
        $region44: #{tpu_custom_call.1} parent=39 // pred_fallthru
          _
        %p211 = scmp.lt.s32.totalorder %s20, 3
        %s212 = scalar_select %p211, %s20, 3
        %s213 = smul.addr %s212, 6
        %s214 = smul.addr %s213, 8
        %s215 = scalar_lea.vmem %s0, %s214
        %p216 = pneg %p41
        %p217 = pneg %p38
        %p218 = pneg %p62
        %p219 = pneg %p59
        %p220 = pneg %p83
        %p221 = pneg %p80
        %p222 = pneg %p104
        %p223 = pneg %p101
        %p224 = pneg %p125
        %p225 = pneg %p122
        %p226 = pneg %p151
        %p227 = pneg %p148
        %s228 = sand.u32 %s138, 1
        %s229 = scalar_lea.sflag [#allocation4], %s228
        %s230 = sand.u32 %s138, 1
        %s231 = smul.addr %s230, 8
        %s232 = scalar_lea.vmem [#allocation5], %s231
        %p233 = scmp.lt.s32.totalorder %s20, 3
        %s234 = scalar_select %p233, %s20, 3
        %s235 = smul.addr %s234, 6
        %s236 = smul.addr %s235, 8
        %s237 = scalar_lea.vmem %s0, %s236
        %v239 = vld [vmem:[%s237] sm:$0xff]
        %v240 = vld [vmem:[%s237 + $0x8] sm:$0xff]
        %v241 = vld [vmem:[%s237 + $0x10] sm:$0xff]
        %v242 = vpack.c.bf16 %v239, %v239
        %v243 = vpack.c.bf16 %v240, %v240
        %v244 = vpack.c.bf16 %v241, %v241
        %v245 = vld [vmem:[#allocation2] sm:$0xff]
        %v246 = vld [vmem:[#allocation2 + $0x8] sm:$0xff]
        %v247 = vld [vmem:[#allocation2 + $0x10] sm:$0xff]
        %v248 = vld [vmem:[#allocation2 + $0x18] sm:$0xff]
        %v249 = vld [vmem:[#allocation2 + $0x20] sm:$0xff]
        %v250 = vld [vmem:[#allocation2 + $0x28] sm:$0xff]
        %v251 = vld [vmem:[#allocation2 + $0x30] sm:$0xff]
        %v252 = vld [vmem:[#allocation2 + $0x38] sm:$0xff]
        %v253 = vld [vmem:[#allocation2 + $0x40] sm:$0xff]
        %v254 = vld [vmem:[#allocation2 + $0x48] sm:$0xff]
        %v255 = vld [vmem:[#allocation2 + $0x50] sm:$0xff]
        %v256 = vld [vmem:[#allocation2 + $0x58] sm:$0xff]
        %v257 = vld [vmem:[#allocation2 + $0x60] sm:$0xff]
        %v258 = vld [vmem:[#allocation2 + $0x68] sm:$0xff]
        %v259 = vld [vmem:[#allocation2 + $0x70] sm:$0xff]
        %v260 = vld [vmem:[#allocation2 + $0x78] sm:$0xff]
        %v261 = vld [vmem:[#allocation2 + $0x80] sm:$0xff]
        %v262 = vld [vmem:[#allocation2 + $0x88] sm:$0xff]
        %v263 = vld [vmem:[#allocation2 + $0x90] sm:$0xff]
        %v264 = vld [vmem:[#allocation2 + $0x98] sm:$0xff]
        %v265 = vld [vmem:[#allocation2 + $0xa0] sm:$0xff]
        %v266 = vld [vmem:[#allocation2 + $0xa8] sm:$0xff]
        %v267 = vld [vmem:[#allocation2 + $0xb0] sm:$0xff]
        %v268 = vld [vmem:[#allocation2 + $0xb8] sm:$0xff]
        %v269 = vld [vmem:[#allocation2 + $0xc0] sm:$0xff]
        %v270 = vld [vmem:[#allocation2 + $0xc8] sm:$0xff]
        %v271 = vld [vmem:[#allocation2 + $0xd0] sm:$0xff]
        %v272 = vld [vmem:[#allocation2 + $0xd8] sm:$0xff]
        %v273 = vld [vmem:[#allocation2 + $0xe0] sm:$0xff]
        %v274 = vld [vmem:[#allocation2 + $0xe8] sm:$0xff]
        %v275 = vld [vmem:[#allocation2 + $0xf0] sm:$0xff]
        %v276 = vld [vmem:[#allocation2 + $0xf8] sm:$0xff]
        %v277 = vld [vmem:[#allocation2 + $0x100] sm:$0xff]
        %v278 = vld [vmem:[#allocation2 + $0x108] sm:$0xff]
        %v279 = vld [vmem:[#allocation2 + $0x110] sm:$0xff]
        %v280 = vld [vmem:[#allocation2 + $0x118] sm:$0xff]
        %v281 = vld [vmem:[#allocation2 + $0x120] sm:$0xff]
        %v282 = vld [vmem:[#allocation2 + $0x128] sm:$0xff]
        %v283 = vld [vmem:[#allocation2 + $0x130] sm:$0xff]
        %v284 = vld [vmem:[#allocation2 + $0x138] sm:$0xff]
        %v285 = vld [vmem:[%s237] sm:$0xfe]
        %v286 = vld [vmem:[%s237 + $0x8] sm:$0xfe]
        %v287 = vld [vmem:[%s237 + $0x10] sm:$0xfe]
        %v288 = vld [vmem:[%s237 + $0x18] sm:$0x1]
        %v289 = vld [vmem:[%s237 + $0x20] sm:$0x1]
        %v290 = vld [vmem:[%s237 + $0x28] sm:$0x1]
        %v291 = vpack.c.bf16 %v288, %v285
        %v292 = vpack.c.bf16 %v289, %v286
        %v293 = vpack.c.bf16 %v290, %v287
        %s294 = scalar_lea.vmem [#allocation2], 320
        %v295 = vld [vmem:[%s294] sm:$0xff]
        %v296 = vld [vmem:[%s294 + $0x8] sm:$0xff]
        %v297 = vld [vmem:[%s294 + $0x10] sm:$0xff]
        %v298 = vld [vmem:[%s294 + $0x18] sm:$0xff]
        %v299 = vld [vmem:[%s294 + $0x20] sm:$0xff]
        %v300 = vld [vmem:[%s294 + $0x28] sm:$0xff]
        %v301 = vld [vmem:[%s294 + $0x30] sm:$0xff]
        %v302 = vld [vmem:[%s294 + $0x38] sm:$0xff]
        %v303 = vld [vmem:[%s294 + $0x40] sm:$0xff]
        %v304 = vld [vmem:[%s294 + $0x48] sm:$0xff]
        %v305 = vld [vmem:[%s294 + $0x50] sm:$0xff]
        %v306 = vld [vmem:[%s294 + $0x58] sm:$0xff]
        %v307 = vld [vmem:[%s294 + $0x60] sm:$0xff]
        %v308 = vld [vmem:[%s294 + $0x68] sm:$0xff]
        %v309 = vld [vmem:[%s294 + $0x70] sm:$0xff]
        %v310 = vld [vmem:[%s294 + $0x78] sm:$0xff]
        %v311 = vld [vmem:[%s294 + $0x80] sm:$0xff]
        %v312 = vld [vmem:[%s294 + $0x88] sm:$0xff]
        %v313 = vld [vmem:[%s294 + $0x90] sm:$0xff]
        %v314 = vld [vmem:[%s294 + $0x98] sm:$0xff]
        %v315 = vld [vmem:[%s294 + $0xa0] sm:$0xff]
        %v316 = vld [vmem:[%s294 + $0xa8] sm:$0xff]
        %v317 = vld [vmem:[%s294 + $0xb0] sm:$0xff]
        %v318 = vld [vmem:[%s294 + $0xb8] sm:$0xff]
        %v319 = vld [vmem:[%s294 + $0xc0] sm:$0xff]
        %v320 = vld [vmem:[%s294 + $0xc8] sm:$0xff]
        %v321 = vld [vmem:[%s294 + $0xd0] sm:$0xff]
        %v322 = vld [vmem:[%s294 + $0xd8] sm:$0xff]
        %v323 = vld [vmem:[%s294 + $0xe0] sm:$0xff]
        %v324 = vld [vmem:[%s294 + $0xe8] sm:$0xff]
        %v325 = vld [vmem:[%s294 + $0xf0] sm:$0xff]
        %v326 = vld [vmem:[%s294 + $0xf8] sm:$0xff]
        %v327 = vld [vmem:[%s294 + $0x100] sm:$0xff]
        %v328 = vld [vmem:[%s294 + $0x108] sm:$0xff]
        %v329 = vld [vmem:[%s294 + $0x110] sm:$0xff]
        %v330 = vld [vmem:[%s294 + $0x118] sm:$0xff]
        %v331 = vld [vmem:[%s294 + $0x120] sm:$0xff]
        %v332 = vld [vmem:[%s294 + $0x128] sm:$0xff]
        %v333 = vld [vmem:[%s294 + $0x130] sm:$0xff]
        %v334 = vld [vmem:[%s294 + $0x138] sm:$0xff]
        %v336 = vshrl.u32 %v291, 16
        %v338 = vshll.u32 %v291, 16
        %v340 = vrot.slane %v338, 1
        %v341 = vor.u32 %v336, %v340
        %v343 = vshrl.u32 %v292, 16
        %v345 = vshll.u32 %v292, 16
        %v347 = vrot.slane %v345, 1
        %v348 = vor.u32 %v343, %v347
        %v350 = vshrl.u32 %v293, 16
        %v352 = vshll.u32 %v293, 16
        %v354 = vrot.slane %v352, 1
        %v355 = vor.u32 %v350, %v354
        %v398 = vunpack.c.l.b16 %v295
        %v399 = vunpack.c.h.b16 %v295
        %v400 = vunpack.c.l.b16 %v296
        %v401 = vunpack.c.h.b16 %v296
        %v402 = vunpack.c.l.b16 %v297
        %v403 = vunpack.c.h.b16 %v297
        %v404 = vunpack.c.l.b16 %v298
        %v405 = vunpack.c.h.b16 %v298
        %v406 = vunpack.c.l.b16 %v299
        %v407 = vunpack.c.h.b16 %v299
        %v408 = vunpack.c.l.b16 %v300
        %v409 = vunpack.c.h.b16 %v300
        %v410 = vunpack.c.l.b16 %v301
        %v411 = vunpack.c.h.b16 %v301
        %v412 = vunpack.c.l.b16 %v302
        %v413 = vunpack.c.h.b16 %v302
        %v414 = vunpack.c.l.b16 %v303
        %v415 = vunpack.c.h.b16 %v303
        %v416 = vunpack.c.l.b16 %v304
        %v417 = vunpack.c.h.b16 %v304
        %v418 = vunpack.c.l.b16 %v305
        %v419 = vunpack.c.h.b16 %v305
        %v420 = vunpack.c.l.b16 %v306
        %v421 = vunpack.c.h.b16 %v306
        %v422 = vunpack.c.l.b16 %v307
        %v423 = vunpack.c.h.b16 %v307
        %v424 = vunpack.c.l.b16 %v308
        %v425 = vunpack.c.h.b16 %v308
        %v426 = vunpack.c.l.b16 %v309
        %v427 = vunpack.c.h.b16 %v309
        %v428 = vunpack.c.l.b16 %v310
        %v429 = vunpack.c.h.b16 %v310
        %v430 = vunpack.c.l.b16 %v311
        %v431 = vunpack.c.h.b16 %v311
        %v432 = vunpack.c.l.b16 %v312
        %v433 = vunpack.c.h.b16 %v312
        %v434 = vunpack.c.l.b16 %v313
        %v435 = vunpack.c.h.b16 %v313
        %v436 = vunpack.c.l.b16 %v314
        %v437 = vunpack.c.h.b16 %v314
        %v438 = vunpack.c.l.b16 %v315
        %v439 = vunpack.c.h.b16 %v315
        %v440 = vunpack.c.l.b16 %v316
        %v441 = vunpack.c.h.b16 %v316
        %v442 = vunpack.c.l.b16 %v317
        %v443 = vunpack.c.h.b16 %v317
        %v444 = vunpack.c.l.b16 %v318
        %v445 = vunpack.c.h.b16 %v318
        %v446 = vunpack.c.l.b16 %v319
        %v447 = vunpack.c.h.b16 %v319
        %v448 = vunpack.c.l.b16 %v320
        %v449 = vunpack.c.h.b16 %v320
        %v450 = vunpack.c.l.b16 %v321
        %v451 = vunpack.c.h.b16 %v321
        %v452 = vunpack.c.l.b16 %v322
        %v453 = vunpack.c.h.b16 %v322
        %v454 = vunpack.c.l.b16 %v323
        %v455 = vunpack.c.h.b16 %v323
        %v456 = vunpack.c.l.b16 %v324
        %v457 = vunpack.c.h.b16 %v324
        %v458 = vunpack.c.l.b16 %v325
        %v459 = vunpack.c.h.b16 %v325
        %v460 = vunpack.c.l.b16 %v326
        %v461 = vunpack.c.h.b16 %v326
        %v462 = vunpack.c.l.b16 %v327
        %v463 = vunpack.c.h.b16 %v327
        %v464 = vunpack.c.l.b16 %v328
        %v465 = vunpack.c.h.b16 %v328
        %v466 = vunpack.c.l.b16 %v329
        %v467 = vunpack.c.h.b16 %v329
        %v468 = vunpack.c.l.b16 %v330
        %v469 = vunpack.c.h.b16 %v330
        %v470 = vunpack.c.l.b16 %v331
        %v471 = vunpack.c.h.b16 %v331
        %v472 = vunpack.c.l.b16 %v332
        %v473 = vunpack.c.h.b16 %v332
        %v474 = vunpack.c.l.b16 %v333
        %v475 = vunpack.c.h.b16 %v333
        %v476 = vunpack.c.l.b16 %v334
        %v477 = vunpack.c.h.b16 %v334
        %v478 = vpack.c.b16 %v400, %v398
        %v479 = vpack.c.b16 %v401, %v399
        %v480 = vpack.c.b16 %v404, %v402
        %v481 = vpack.c.b16 %v405, %v403
        %v482 = vpack.c.b16 %v408, %v406
        %v483 = vpack.c.b16 %v409, %v407
        %v484 = vpack.c.b16 %v412, %v410
        %v485 = vpack.c.b16 %v413, %v411
        %v486 = vpack.c.b16 %v416, %v414
        %v487 = vpack.c.b16 %v417, %v415
        %v488 = vpack.c.b16 %v420, %v418
        %v489 = vpack.c.b16 %v421, %v419
        %v490 = vpack.c.b16 %v424, %v422
        %v491 = vpack.c.b16 %v425, %v423
        %v492 = vpack.c.b16 %v428, %v426
        %v493 = vpack.c.b16 %v429, %v427
        %v494 = vpack.c.b16 %v432, %v430
        %v495 = vpack.c.b16 %v433, %v431
        %v496 = vpack.c.b16 %v436, %v434
        %v497 = vpack.c.b16 %v437, %v435
        %v498 = vpack.c.b16 %v440, %v438
        %v499 = vpack.c.b16 %v441, %v439
        %v500 = vpack.c.b16 %v444, %v442
        %v501 = vpack.c.b16 %v445, %v443
        %v502 = vpack.c.b16 %v448, %v446
        %v503 = vpack.c.b16 %v449, %v447
        %v504 = vpack.c.b16 %v452, %v450
        %v505 = vpack.c.b16 %v453, %v451
        %v506 = vpack.c.b16 %v456, %v454
        %v507 = vpack.c.b16 %v457, %v455
        %v508 = vpack.c.b16 %v460, %v458
        %v509 = vpack.c.b16 %v461, %v459
        %v510 = vpack.c.b16 %v464, %v462
        %v511 = vpack.c.b16 %v465, %v463
        %v512 = vpack.c.b16 %v468, %v466
        %v513 = vpack.c.b16 %v469, %v467
        %v514 = vpack.c.b16 %v472, %v470
        %v515 = vpack.c.b16 %v473, %v471
        %v516 = vpack.c.b16 %v476, %v474
        %v517 = vpack.c.b16 %v477, %v475
        %vm558 = vcmask 523264
        %v560 = vsel %vm558, %v355, 0
        %562 = vmatprep.subr.bf16.mxu0 %v479
        %563 = vmatpush1.bf16.msra.mxu0 %v478
        %564 = vmatprep.subr.bf16.mxu0 %v481
        %565 = vmatpush1.bf16.msra.mxu0 %v480
        %566 = vmatprep.subr.bf16.mxu0 %v483
        %567 = vmatpush1.bf16.msra.mxu0 %v482
        %568 = vmatprep.subr.bf16.mxu0 %v485
        %569 = vmatpush1.bf16.msra.mxu0 %v484
        %570 = vmatprep.subr.bf16.mxu0 %v487
        %571 = vmatpush1.bf16.msra.mxu0 %v486
        %572 = vmatprep.subr.bf16.mxu0 %v489
        %573 = vmatpush1.bf16.msra.mxu0 %v488
        %574 = vmatprep.subr.bf16.mxu0 %v491
        %575 = vmatpush1.bf16.msra.mxu0 %v490
        %576 = vmatprep.subr.bf16.mxu0 %v493
        %577 = vmatpush1.bf16.msra.mxu0 %v492
        %578 = vmatprep.subr.bf16.mxu0 %v495
        %579 = vmatpush1.bf16.msra.mxu0 %v494
        %580 = vmatprep.subr.bf16.mxu0 %v497
        %581 = vmatpush1.bf16.msra.mxu0 %v496
        %582 = vmatprep.subr.bf16.mxu0 %v499
        %583 = vmatpush1.bf16.msra.mxu0 %v498
        %584 = vmatprep.subr.bf16.mxu0 %v501
        %585 = vmatpush1.bf16.msra.mxu0 %v500
        %586 = vmatprep.subr.bf16.mxu0 %v503
        %587 = vmatpush1.bf16.msra.mxu0 %v502
        %588 = vmatprep.subr.bf16.mxu0 %v505
        %589 = vmatpush1.bf16.msra.mxu0 %v504
        %590 = vmatprep.subr.bf16.mxu0 %v507
        %591 = vmatpush1.bf16.msra.mxu0 %v506
        %592 = vmatprep.subr.bf16.mxu0 %v509
        %593 = vmatpush1.bf16.msra.mxu0 %v508
        %594 = vmatprep.mubr.bf16.mxu0 %v348
        %595 = vmatmul.mubr.bf16.gmra.mrb[0].mxu0 %v341
        %v596 = vpop.f32.mrb[0].mxu0
        %v597 = vadd.f32 0.0, %v596
        %v598 = vpop.f32.mrb[0].mxu0
        %v599 = vadd.f32 0.0, %v598
        %v600 = vpop.f32.mrb[0].mxu0
        %v601 = vpop.f32.mrb[0].mxu0
        %602 = vdwg.mxu0
        %603 = vmatprep.subr.bf16.mxu0 %v511
        %604 = vmatpush1.bf16.msra.mxu0 %v510
        %605 = vmatprep.subr.bf16.mxu0 %v513
        %606 = vmatpush1.bf16.msra.mxu0 %v512
        %607 = vmatprep.subr.bf16.mxu0 %v515
        %608 = vmatpush1.bf16.msra.mxu0 %v514
        %609 = vmatprep.subr.bf16.mxu0 %v517
        %610 = vmatpush1.bf16.msra.mxu0 %v516
        %611 = vmatprep.subr.bf16.mxu0 0
        %612 = vmatpush1.bf16.msra.mxu0 0
        %613 = vmatprep.subr.bf16.mxu0 0
        %614 = vmatpush1.bf16.msra.mxu0 0
        %615 = vmatprep.subr.bf16.mxu0 0
        %616 = vmatpush1.bf16.msra.mxu0 0
        %617 = vmatprep.subr.bf16.mxu0 0
        %618 = vmatpush1.bf16.msra.mxu0 0
        %619 = vmatprep.subr.bf16.mxu0 0
        %620 = vmatpush1.bf16.msra.mxu0 0
        %621 = vmatprep.subr.bf16.mxu0 0
        %622 = vmatpush1.bf16.msra.mxu0 0
        %623 = vmatprep.subr.bf16.mxu0 0
        %624 = vmatpush1.bf16.msra.mxu0 0
        %625 = vmatprep.subr.bf16.mxu0 0
        %626 = vmatpush1.bf16.msra.mxu0 0
        %627 = vmatprep.subr.bf16.mxu0 0
        %628 = vmatpush1.bf16.msra.mxu0 0
        %629 = vmatprep.subr.bf16.mxu0 0
        %630 = vmatpush1.bf16.msra.mxu0 0
        %631 = vmatprep.subr.bf16.mxu0 0
        %632 = vmatpush1.bf16.msra.mxu0 0
        %633 = vmatprep.subr.bf16.mxu0 0
        %634 = vmatpush1.bf16.msra.mxu0 0
        %635 = vmatprep.mubr.bf16.mxu0 0
        %636 = vmatmul.mubr.bf16.gmra.mrb[0].mxu0 %v560
        %v637 = vpop.f32.mrb[0].mxu0
        %v638 = vadd.f32 %v597, %v637
        %v639 = vpop.f32.mrb[0].mxu0
        %v640 = vadd.f32 %v599, %v639
        %v641 = vpop.f32.mrb[0].mxu0
        %v642 = vpop.f32.mrb[0].mxu0
        %643 = vdwg.mxu0
        %v684 = vunpack.c.l.b16 %v245
        %v685 = vunpack.c.h.b16 %v245
        %v686 = vunpack.c.l.b16 %v246
        %v687 = vunpack.c.h.b16 %v246
        %v688 = vunpack.c.l.b16 %v247
        %v689 = vunpack.c.h.b16 %v247
        %v690 = vunpack.c.l.b16 %v248
        %v691 = vunpack.c.h.b16 %v248
        %v692 = vunpack.c.l.b16 %v249
        %v693 = vunpack.c.h.b16 %v249
        %v694 = vunpack.c.l.b16 %v250
        %v695 = vunpack.c.h.b16 %v250
        %v696 = vunpack.c.l.b16 %v251
        %v697 = vunpack.c.h.b16 %v251
        %v698 = vunpack.c.l.b16 %v252
        %v699 = vunpack.c.h.b16 %v252
        %v700 = vunpack.c.l.b16 %v253
        %v701 = vunpack.c.h.b16 %v253
        %v702 = vunpack.c.l.b16 %v254
        %v703 = vunpack.c.h.b16 %v254
        %v704 = vunpack.c.l.b16 %v255
        %v705 = vunpack.c.h.b16 %v255
        %v706 = vunpack.c.l.b16 %v256
        %v707 = vunpack.c.h.b16 %v256
        %v708 = vunpack.c.l.b16 %v257
        %v709 = vunpack.c.h.b16 %v257
        %v710 = vunpack.c.l.b16 %v258
        %v711 = vunpack.c.h.b16 %v258
        %v712 = vunpack.c.l.b16 %v259
        %v713 = vunpack.c.h.b16 %v259
        %v714 = vunpack.c.l.b16 %v260
        %v715 = vunpack.c.h.b16 %v260
        %v716 = vunpack.c.l.b16 %v261
        %v717 = vunpack.c.h.b16 %v261
        %v718 = vunpack.c.l.b16 %v262
        %v719 = vunpack.c.h.b16 %v262
        %v720 = vunpack.c.l.b16 %v263
        %v721 = vunpack.c.h.b16 %v263
        %v722 = vunpack.c.l.b16 %v264
        %v723 = vunpack.c.h.b16 %v264
        %v724 = vunpack.c.l.b16 %v265
        %v725 = vunpack.c.h.b16 %v265
        %v726 = vunpack.c.l.b16 %v266
        %v727 = vunpack.c.h.b16 %v266
        %v728 = vunpack.c.l.b16 %v267
        %v729 = vunpack.c.h.b16 %v267
        %v730 = vunpack.c.l.b16 %v268
        %v731 = vunpack.c.h.b16 %v268
        %v732 = vunpack.c.l.b16 %v269
        %v733 = vunpack.c.h.b16 %v269
        %v734 = vunpack.c.l.b16 %v270
        %v735 = vunpack.c.h.b16 %v270
        %v736 = vunpack.c.l.b16 %v271
        %v737 = vunpack.c.h.b16 %v271
        %v738 = vunpack.c.l.b16 %v272
        %v739 = vunpack.c.h.b16 %v272
        %v740 = vunpack.c.l.b16 %v273
        %v741 = vunpack.c.h.b16 %v273
        %v742 = vunpack.c.l.b16 %v274
        %v743 = vunpack.c.h.b16 %v274
        %v744 = vunpack.c.l.b16 %v275
        %v745 = vunpack.c.h.b16 %v275
        %v746 = vunpack.c.l.b16 %v276
        %v747 = vunpack.c.h.b16 %v276
        %v748 = vunpack.c.l.b16 %v277
        %v749 = vunpack.c.h.b16 %v277
        %v750 = vunpack.c.l.b16 %v278
        %v751 = vunpack.c.h.b16 %v278
        %v752 = vunpack.c.l.b16 %v279
        %v753 = vunpack.c.h.b16 %v279
        %v754 = vunpack.c.l.b16 %v280
        %v755 = vunpack.c.h.b16 %v280
        %v756 = vunpack.c.l.b16 %v281
        %v757 = vunpack.c.h.b16 %v281
        %v758 = vunpack.c.l.b16 %v282
        %v759 = vunpack.c.h.b16 %v282
        %v760 = vunpack.c.l.b16 %v283
        %v761 = vunpack.c.h.b16 %v283
        %v762 = vunpack.c.l.b16 %v284
        %v763 = vunpack.c.h.b16 %v284
        %v764 = vpack.c.b16 %v686, %v684
        %v765 = vpack.c.b16 %v687, %v685
        %v766 = vpack.c.b16 %v690, %v688
        %v767 = vpack.c.b16 %v691, %v689
        %v768 = vpack.c.b16 %v694, %v692
        %v769 = vpack.c.b16 %v695, %v693
        %v770 = vpack.c.b16 %v698, %v696
        %v771 = vpack.c.b16 %v699, %v697
        %v772 = vpack.c.b16 %v702, %v700
        %v773 = vpack.c.b16 %v703, %v701
        %v774 = vpack.c.b16 %v706, %v704
        %v775 = vpack.c.b16 %v707, %v705
        %v776 = vpack.c.b16 %v710, %v708
        %v777 = vpack.c.b16 %v711, %v709
        %v778 = vpack.c.b16 %v714, %v712
        %v779 = vpack.c.b16 %v715, %v713
        %v780 = vpack.c.b16 %v718, %v716
        %v781 = vpack.c.b16 %v719, %v717
        %v782 = vpack.c.b16 %v722, %v720
        %v783 = vpack.c.b16 %v723, %v721
        %v784 = vpack.c.b16 %v726, %v724
        %v785 = vpack.c.b16 %v727, %v725
        %v786 = vpack.c.b16 %v730, %v728
        %v787 = vpack.c.b16 %v731, %v729
        %v788 = vpack.c.b16 %v734, %v732
        %v789 = vpack.c.b16 %v735, %v733
        %v790 = vpack.c.b16 %v738, %v736
        %v791 = vpack.c.b16 %v739, %v737
        %v792 = vpack.c.b16 %v742, %v740
        %v793 = vpack.c.b16 %v743, %v741
        %v794 = vpack.c.b16 %v746, %v744
        %v795 = vpack.c.b16 %v747, %v745
        %v796 = vpack.c.b16 %v750, %v748
        %v797 = vpack.c.b16 %v751, %v749
        %v798 = vpack.c.b16 %v754, %v752
        %v799 = vpack.c.b16 %v755, %v753
        %v800 = vpack.c.b16 %v758, %v756
        %v801 = vpack.c.b16 %v759, %v757
        %v802 = vpack.c.b16 %v762, %v760
        %v803 = vpack.c.b16 %v763, %v761
        %v845 = vsel %vm558, %v244, 0
        %847 = vmatprep.subr.bf16.mxu0 %v765
        %848 = vmatpush1.bf16.msra.mxu0 %v764
        %849 = vmatprep.subr.bf16.mxu0 %v767
        %850 = vmatpush1.bf16.msra.mxu0 %v766
        %851 = vmatprep.subr.bf16.mxu0 %v769
        %852 = vmatpush1.bf16.msra.mxu0 %v768
        %853 = vmatprep.subr.bf16.mxu0 %v771
        %854 = vmatpush1.bf16.msra.mxu0 %v770
        %855 = vmatprep.subr.bf16.mxu0 %v773
        %856 = vmatpush1.bf16.msra.mxu0 %v772
        %857 = vmatprep.subr.bf16.mxu0 %v775
        %858 = vmatpush1.bf16.msra.mxu0 %v774
        %859 = vmatprep.subr.bf16.mxu0 %v777
        %860 = vmatpush1.bf16.msra.mxu0 %v776
        %861 = vmatprep.subr.bf16.mxu0 %v779
        %862 = vmatpush1.bf16.msra.mxu0 %v778
        %863 = vmatprep.subr.bf16.mxu0 %v781
        %864 = vmatpush1.bf16.msra.mxu0 %v780
        %865 = vmatprep.subr.bf16.mxu0 %v783
        %866 = vmatpush1.bf16.msra.mxu0 %v782
        %867 = vmatprep.subr.bf16.mxu0 %v785
        %868 = vmatpush1.bf16.msra.mxu0 %v784
        %869 = vmatprep.subr.bf16.mxu0 %v787
        %870 = vmatpush1.bf16.msra.mxu0 %v786
        %871 = vmatprep.subr.bf16.mxu0 %v789
        %872 = vmatpush1.bf16.msra.mxu0 %v788
        %873 = vmatprep.subr.bf16.mxu0 %v791
        %874 = vmatpush1.bf16.msra.mxu0 %v790
        %875 = vmatprep.subr.bf16.mxu0 %v793
        %876 = vmatpush1.bf16.msra.mxu0 %v792
        %877 = vmatprep.subr.bf16.mxu0 %v795
        %878 = vmatpush1.bf16.msra.mxu0 %v794
        %879 = vmatprep.mubr.bf16.mxu0 %v243
        %880 = vmatmul.mubr.bf16.gmra.mrb[0].mxu0 %v242
        %v881 = vpop.f32.mrb[0].mxu0
        %v882 = vadd.f32 %v638, %v881
        %v883 = vpop.f32.mrb[0].mxu0
        %v884 = vadd.f32 %v640, %v883
        %v885 = vpop.f32.mrb[0].mxu0
        %v886 = vpop.f32.mrb[0].mxu0
        %887 = vdwg.mxu0
        %888 = vmatprep.subr.bf16.mxu0 %v797
        %889 = vmatpush1.bf16.msra.mxu0 %v796
        %890 = vmatprep.subr.bf16.mxu0 %v799
        %891 = vmatpush1.bf16.msra.mxu0 %v798
        %892 = vmatprep.subr.bf16.mxu0 %v801
        %893 = vmatpush1.bf16.msra.mxu0 %v800
        %894 = vmatprep.subr.bf16.mxu0 %v803
        %895 = vmatpush1.bf16.msra.mxu0 %v802
        %896 = vmatprep.subr.bf16.mxu0 0
        %897 = vmatpush1.bf16.msra.mxu0 0
        %898 = vmatprep.subr.bf16.mxu0 0
        %899 = vmatpush1.bf16.msra.mxu0 0
        %900 = vmatprep.subr.bf16.mxu0 0
        %901 = vmatpush1.bf16.msra.mxu0 0
        %902 = vmatprep.subr.bf16.mxu0 0
        %903 = vmatpush1.bf16.msra.mxu0 0
        %904 = vmatprep.subr.bf16.mxu0 0
        %905 = vmatpush1.bf16.msra.mxu0 0
        %906 = vmatprep.subr.bf16.mxu0 0
        %907 = vmatpush1.bf16.msra.mxu0 0
        %908 = vmatprep.subr.bf16.mxu0 0
        %909 = vmatpush1.bf16.msra.mxu0 0
        %910 = vmatprep.subr.bf16.mxu0 0
        %911 = vmatpush1.bf16.msra.mxu0 0
        %912 = vmatprep.subr.bf16.mxu0 0
        %913 = vmatpush1.bf16.msra.mxu0 0
        %914 = vmatprep.subr.bf16.mxu0 0
        %915 = vmatpush1.bf16.msra.mxu0 0
        %916 = vmatprep.subr.bf16.mxu0 0
        %917 = vmatpush1.bf16.msra.mxu0 0
        %918 = vmatprep.subr.bf16.mxu0 0
        %919 = vmatpush1.bf16.msra.mxu0 0
        %920 = vmatprep.mubr.bf16.mxu0 0
        %921 = vmatmul.mubr.bf16.gmra.mrb[0].mxu0 %v845
        %v922 = vpop.f32.mrb[0].mxu0
        %v923 = vadd.f32 %v882, %v922
        %v924 = vpop.f32.mrb[0].mxu0
        %v925 = vadd.f32 %v884, %v924
        %v926 = vpop.f32.mrb[0].mxu0
        %v927 = vpop.f32.mrb[0].mxu0
        %928 = vdwg.mxu0
        %v929 = vld [vmem:[%s237] sm:$0xfc]
        %v930 = vld [vmem:[%s237 + $0x8] sm:$0xfc]
        %v931 = vld [vmem:[%s237 + $0x10] sm:$0xfc]
        %v932 = vld [vmem:[%s237 + $0x18] sm:$0x3]
        %v933 = vld [vmem:[%s237 + $0x20] sm:$0x3]
        %v934 = vld [vmem:[%s237 + $0x28] sm:$0x3]
        %v935 = vpack.c.bf16 %v932, %v929
        %v936 = vpack.c.bf16 %v933, %v930
        %v937 = vpack.c.bf16 %v934, %v931
        %s938 = scalar_lea.vmem [#allocation2], 640
        %v939 = vld [vmem:[%s938] sm:$0xff]
        %v940 = vld [vmem:[%s938 + $0x8] sm:$0xff]
        %v941 = vld [vmem:[%s938 + $0x10] sm:$0xff]
        %v942 = vld [vmem:[%s938 + $0x18] sm:$0xff]
        %v943 = vld [vmem:[%s938 + $0x20] sm:$0xff]
        %v944 = vld [vmem:[%s938 + $0x28] sm:$0xff]
        %v945 = vld [vmem:[%s938 + $0x30] sm:$0xff]
        %v946 = vld [vmem:[%s938 + $0x38] sm:$0xff]
        %v947 = vld [vmem:[%s938 + $0x40] sm:$0xff]
        %v948 = vld [vmem:[%s938 + $0x48] sm:$0xff]
        %v949 = vld [vmem:[%s938 + $0x50] sm:$0xff]
        %v950 = vld [vmem:[%s938 + $0x58] sm:$0xff]
        %v951 = vld [vmem:[%s938 + $0x60] sm:$0xff]
        %v952 = vld [vmem:[%s938 + $0x68] sm:$0xff]
        %v953 = vld [vmem:[%s938 + $0x70] sm:$0xff]
        %v954 = vld [vmem:[%s938 + $0x78] sm:$0xff]
        %v955 = vld [vmem:[%s938 + $0x80] sm:$0xff]
        %v956 = vld [vmem:[%s938 + $0x88] sm:$0xff]
        %v957 = vld [vmem:[%s938 + $0x90] sm:$0xff]
        %v958 = vld [vmem:[%s938 + $0x98] sm:$0xff]
        %v959 = vld [vmem:[%s938 + $0xa0] sm:$0xff]
        %v960 = vld [vmem:[%s938 + $0xa8] sm:$0xff]
        %v961 = vld [vmem:[%s938 + $0xb0] sm:$0xff]
        %v962 = vld [vmem:[%s938 + $0xb8] sm:$0xff]
        %v963 = vld [vmem:[%s938 + $0xc0] sm:$0xff]
        %v964 = vld [vmem:[%s938 + $0xc8] sm:$0xff]
        %v965 = vld [vmem:[%s938 + $0xd0] sm:$0xff]
        %v966 = vld [vmem:[%s938 + $0xd8] sm:$0xff]
        %v967 = vld [vmem:[%s938 + $0xe0] sm:$0xff]
        %v968 = vld [vmem:[%s938 + $0xe8] sm:$0xff]
        %v969 = vld [vmem:[%s938 + $0xf0] sm:$0xff]
        %v970 = vld [vmem:[%s938 + $0xf8] sm:$0xff]
        %v971 = vld [vmem:[%s938 + $0x100] sm:$0xff]
        %v972 = vld [vmem:[%s938 + $0x108] sm:$0xff]
        %v973 = vld [vmem:[%s938 + $0x110] sm:$0xff]
        %v974 = vld [vmem:[%s938 + $0x118] sm:$0xff]
        %v975 = vld [vmem:[%s938 + $0x120] sm:$0xff]
        %v976 = vld [vmem:[%s938 + $0x128] sm:$0xff]
        %v977 = vld [vmem:[%s938 + $0x130] sm:$0xff]
        %v978 = vld [vmem:[%s938 + $0x138] sm:$0xff]
        %v982 = vrot.slane %v935, 1
        %v983 = vrot.slane %v936, 1
        %v984 = vrot.slane %v937, 1
        %v1027 = vunpack.c.l.b16 %v939
        %v1028 = vunpack.c.h.b16 %v939
        %v1029 = vunpack.c.l.b16 %v940
        %v1030 = vunpack.c.h.b16 %v940
        %v1031 = vunpack.c.l.b16 %v941
        %v1032 = vunpack.c.h.b16 %v941
        %v1033 = vunpack.c.l.b16 %v942
        %v1034 = vunpack.c.h.b16 %v942
        %v1035 = vunpack.c.l.b16 %v943
        %v1036 = vunpack.c.h.b16 %v943
        %v1037 = vunpack.c.l.b16 %v944
        %v1038 = vunpack.c.h.b16 %v944
        %v1039 = vunpack.c.l.b16 %v945
        %v1040 = vunpack.c.h.b16 %v945
        %v1041 = vunpack.c.l.b16 %v946
        %v1042 = vunpack.c.h.b16 %v946
        %v1043 = vunpack.c.l.b16 %v947
        %v1044 = vunpack.c.h.b16 %v947
        %v1045 = vunpack.c.l.b16 %v948
        %v1046 = vunpack.c.h.b16 %v948
        %v1047 = vunpack.c.l.b16 %v949
        %v1048 = vunpack.c.h.b16 %v949
        %v1049 = vunpack.c.l.b16 %v950
        %v1050 = vunpack.c.h.b16 %v950
        %v1051 = vunpack.c.l.b16 %v951
        %v1052 = vunpack.c.h.b16 %v951
        %v1053 = vunpack.c.l.b16 %v952
        %v1054 = vunpack.c.h.b16 %v952
        %v1055 = vunpack.c.l.b16 %v953
        %v1056 = vunpack.c.h.b16 %v953
        %v1057 = vunpack.c.l.b16 %v954
        %v1058 = vunpack.c.h.b16 %v954
        %v1059 = vunpack.c.l.b16 %v955
        %v1060 = vunpack.c.h.b16 %v955
        %v1061 = vunpack.c.l.b16 %v956
        %v1062 = vunpack.c.h.b16 %v956
        %v1063 = vunpack.c.l.b16 %v957
        %v1064 = vunpack.c.h.b16 %v957
        %v1065 = vunpack.c.l.b16 %v958
        %v1066 = vunpack.c.h.b16 %v958
        %v1067 = vunpack.c.l.b16 %v959
        %v1068 = vunpack.c.h.b16 %v959
        %v1069 = vunpack.c.l.b16 %v960
        %v1070 = vunpack.c.h.b16 %v960
        %v1071 = vunpack.c.l.b16 %v961
        %v1072 = vunpack.c.h.b16 %v961
        %v1073 = vunpack.c.l.b16 %v962
        %v1074 = vunpack.c.h.b16 %v962
        %v1075 = vunpack.c.l.b16 %v963
        %v1076 = vunpack.c.h.b16 %v963
        %v1077 = vunpack.c.l.b16 %v964
        %v1078 = vunpack.c.h.b16 %v964
        %v1079 = vunpack.c.l.b16 %v965
        %v1080 = vunpack.c.h.b16 %v965
        %v1081 = vunpack.c.l.b16 %v966
        %v1082 = vunpack.c.h.b16 %v966
        %v1083 = vunpack.c.l.b16 %v967
        %v1084 = vunpack.c.h.b16 %v967
        %v1085 = vunpack.c.l.b16 %v968
        %v1086 = vunpack.c.h.b16 %v968
        %v1087 = vunpack.c.l.b16 %v969
        %v1088 = vunpack.c.h.b16 %v969
        %v1089 = vunpack.c.l.b16 %v970
        %v1090 = vunpack.c.h.b16 %v970
        %v1091 = vunpack.c.l.b16 %v971
        %v1092 = vunpack.c.h.b16 %v971
        %v1093 = vunpack.c.l.b16 %v972
        %v1094 = vunpack.c.h.b16 %v972
        %v1095 = vunpack.c.l.b16 %v973
        %v1096 = vunpack.c.h.b16 %v973
        %v1097 = vunpack.c.l.b16 %v974
        %v1098 = vunpack.c.h.b16 %v974
        %v1099 = vunpack.c.l.b16 %v975
        %v1100 = vunpack.c.h.b16 %v975
        %v1101 = vunpack.c.l.b16 %v976
        %v1102 = vunpack.c.h.b16 %v976
        %v1103 = vunpack.c.l.b16 %v977
        %v1104 = vunpack.c.h.b16 %v977
        %v1105 = vunpack.c.l.b16 %v978
        %v1106 = vunpack.c.h.b16 %v978
        %v1107 = vpack.c.b16 %v1029, %v1027
        %v1108 = vpack.c.b16 %v1030, %v1028
        %v1109 = vpack.c.b16 %v1033, %v1031
        %v1110 = vpack.c.b16 %v1034, %v1032
        %v1111 = vpack.c.b16 %v1037, %v1035
        %v1112 = vpack.c.b16 %v1038, %v1036
        %v1113 = vpack.c.b16 %v1041, %v1039
        %v1114 = vpack.c.b16 %v1042, %v1040
        %v1115 = vpack.c.b16 %v1045, %v1043
        %v1116 = vpack.c.b16 %v1046, %v1044
        %v1117 = vpack.c.b16 %v1049, %v1047
        %v1118 = vpack.c.b16 %v1050, %v1048
        %v1119 = vpack.c.b16 %v1053, %v1051
        %v1120 = vpack.c.b16 %v1054, %v1052
        %v1121 = vpack.c.b16 %v1057, %v1055
        %v1122 = vpack.c.b16 %v1058, %v1056
        %v1123 = vpack.c.b16 %v1061, %v1059
        %v1124 = vpack.c.b16 %v1062, %v1060
        %v1125 = vpack.c.b16 %v1065, %v1063
        %v1126 = vpack.c.b16 %v1066, %v1064
        %v1127 = vpack.c.b16 %v1069, %v1067
        %v1128 = vpack.c.b16 %v1070, %v1068
        %v1129 = vpack.c.b16 %v1073, %v1071
        %v1130 = vpack.c.b16 %v1074, %v1072
        %v1131 = vpack.c.b16 %v1077, %v1075
        %v1132 = vpack.c.b16 %v1078, %v1076
        %v1133 = vpack.c.b16 %v1081, %v1079
        %v1134 = vpack.c.b16 %v1082, %v1080
        %v1135 = vpack.c.b16 %v1085, %v1083
        %v1136 = vpack.c.b16 %v1086, %v1084
        %v1137 = vpack.c.b16 %v1089, %v1087
        %v1138 = vpack.c.b16 %v1090, %v1088
        %v1139 = vpack.c.b16 %v1093, %v1091
        %v1140 = vpack.c.b16 %v1094, %v1092
        %v1141 = vpack.c.b16 %v1097, %v1095
        %v1142 = vpack.c.b16 %v1098, %v1096
        %v1143 = vpack.c.b16 %v1101, %v1099
        %v1144 = vpack.c.b16 %v1102, %v1100
        %v1145 = vpack.c.b16 %v1105, %v1103
        %v1146 = vpack.c.b16 %v1106, %v1104
        %v1188 = vsel %vm558, %v984, 0
        %1190 = vmatprep.subr.bf16.mxu0 %v1108
        %1191 = vmatpush1.bf16.msra.mxu0 %v1107
        %1192 = vmatprep.subr.bf16.mxu0 %v1110
        %1193 = vmatpush1.bf16.msra.mxu0 %v1109
        %1194 = vmatprep.subr.bf16.mxu0 %v1112
        %1195 = vmatpush1.bf16.msra.mxu0 %v1111
        %1196 = vmatprep.subr.bf16.mxu0 %v1114
        %1197 = vmatpush1.bf16.msra.mxu0 %v1113
        %1198 = vmatprep.subr.bf16.mxu0 %v1116
        %1199 = vmatpush1.bf16.msra.mxu0 %v1115
        %1200 = vmatprep.subr.bf16.mxu0 %v1118
        %1201 = vmatpush1.bf16.msra.mxu0 %v1117
        %1202 = vmatprep.subr.bf16.mxu0 %v1120
        %1203 = vmatpush1.bf16.msra.mxu0 %v1119
        %1204 = vmatprep.subr.bf16.mxu0 %v1122
        %1205 = vmatpush1.bf16.msra.mxu0 %v1121
        %1206 = vmatprep.subr.bf16.mxu0 %v1124
        %1207 = vmatpush1.bf16.msra.mxu0 %v1123
        %1208 = vmatprep.subr.bf16.mxu0 %v1126
        %1209 = vmatpush1.bf16.msra.mxu0 %v1125
        %1210 = vmatprep.subr.bf16.mxu0 %v1128
        %1211 = vmatpush1.bf16.msra.mxu0 %v1127
        %1212 = vmatprep.subr.bf16.mxu0 %v1130
        %1213 = vmatpush1.bf16.msra.mxu0 %v1129
        %1214 = vmatprep.subr.bf16.mxu0 %v1132
        %1215 = vmatpush1.bf16.msra.mxu0 %v1131
        %1216 = vmatprep.subr.bf16.mxu0 %v1134
        %1217 = vmatpush1.bf16.msra.mxu0 %v1133
        %1218 = vmatprep.subr.bf16.mxu0 %v1136
        %1219 = vmatpush1.bf16.msra.mxu0 %v1135
        %1220 = vmatprep.subr.bf16.mxu0 %v1138
        %1221 = vmatpush1.bf16.msra.mxu0 %v1137
        %1222 = vmatprep.mubr.bf16.mxu0 %v983
        %1223 = vmatmul.mubr.bf16.gmra.mrb[0].mxu0 %v982
        %v1224 = vpop.f32.mrb[0].mxu0
        %v1225 = vadd.f32 0.0, %v1224
        %v1226 = vpop.f32.mrb[0].mxu0
        %v1227 = vadd.f32 0.0, %v1226
        %v1228 = vpop.f32.mrb[0].mxu0
        %v1229 = vpop.f32.mrb[0].mxu0
        %1230 = vdwg.mxu0
        %1231 = vmatprep.subr.bf16.mxu0 %v1140
        %1232 = vmatpush1.bf16.msra.mxu0 %v1139
        %1233 = vmatprep.subr.bf16.mxu0 %v1142
        %1234 = vmatpush1.bf16.msra.mxu0 %v1141
        %1235 = vmatprep.subr.bf16.mxu0 %v1144
        %1236 = vmatpush1.bf16.msra.mxu0 %v1143
        %1237 = vmatprep.subr.bf16.mxu0 %v1146
        %1238 = vmatpush1.bf16.msra.mxu0 %v1145
        %1239 = vmatprep.subr.bf16.mxu0 0
        %1240 = vmatpush1.bf16.msra.mxu0 0
        %1241 = vmatprep.subr.bf16.mxu0 0
        %1242 = vmatpush1.bf16.msra.mxu0 0
        %1243 = vmatprep.subr.bf16.mxu0 0
        %1244 = vmatpush1.bf16.msra.mxu0 0
        %1245 = vmatprep.subr.bf16.mxu0 0
        %1246 = vmatpush1.bf16.msra.mxu0 0
        %1247 = vmatprep.subr.bf16.mxu0 0
        %1248 = vmatpush1.bf16.msra.mxu0 0
        %1249 = vmatprep.subr.bf16.mxu0 0
        %1250 = vmatpush1.bf16.msra.mxu0 0
        %1251 = vmatprep.subr.bf16.mxu0 0
        %1252 = vmatpush1.bf16.msra.mxu0 0
        %1253 = vmatprep.subr.bf16.mxu0 0
        %1254 = vmatpush1.bf16.msra.mxu0 0
        %1255 = vmatprep.subr.bf16.mxu0 0
        %1256 = vmatpush1.bf16.msra.mxu0 0
        %1257 = vmatprep.subr.bf16.mxu0 0
        %1258 = vmatpush1.bf16.msra.mxu0 0
        %1259 = vmatprep.subr.bf16.mxu0 0
        %1260 = vmatpush1.bf16.msra.mxu0 0
        %1261 = vmatprep.subr.bf16.mxu0 0
        %1262 = vmatpush1.bf16.msra.mxu0 0
        %1263 = vmatprep.mubr.bf16.mxu0 0
        %1264 = vmatmul.mubr.bf16.gmra.mrb[0].mxu0 %v1188
        %v1265 = vpop.f32.mrb[0].mxu0
        %v1266 = vadd.f32 %v1225, %v1265
        %v1267 = vpop.f32.mrb[0].mxu0
        %v1268 = vadd.f32 %v1227, %v1267
        %v1269 = vpop.f32.mrb[0].mxu0
        %v1270 = vpop.f32.mrb[0].mxu0
        %1271 = vdwg.mxu0
        %v1272 = vadd.f32 %v923, %v1266
        %v1273 = vadd.f32 %v925, %v1268
        %v1274 = vld [vmem:[%s2] sm:$0x3]
        %v1276 = vlaneseq
        %v1277 = vshrl.u32 %v1276, 7
        %v1278 = vsub.s32 0, %v1277
        %v1279 = vrot.slane %v1274, %v1278
        %v1280 = vlaneseq
        %v1281 = vshrl.u32 %v1280, 7
        %v1282 = vsub.s32 1, %v1281
        %v1283 = vrot.slane %v1274, %v1282
        %v1286 = vadd.f32 %v1272, %v1279
        %v1287 = vadd.f32 %v1273, %v1283
        %v1288 = vmax.f32 %v1286, 0.0
        %v1289 = vmax.f32 %v1287, 0.0
        %v1290 = vpack.c.bf16 %v1288, %v1288
        %v1291 = vpack.c.bf16 %v1289, %v1289
        %v1292 = vld [vmem:[%s3] sm:$0xf]
        %v1293 = vld [vmem:[%s3 + $0x4] sm:$0xf]
        %v1294 = vld [vmem:[%s3 + $0x8] sm:$0xf]
        %v1295 = vld [vmem:[%s3 + $0xc] sm:$0xf]
        %v1296 = vld [vmem:[%s3 + $0x10] sm:$0xf]
        %v1297 = vld [vmem:[%s3 + $0x14] sm:$0xf]
        %v1298 = vld [vmem:[%s3 + $0x18] sm:$0xf]
        %v1299 = vld [vmem:[%s3 + $0x1c] sm:$0xf]
        %v1300 = vld [vmem:[%s3 + $0x20] sm:$0xf]
        %v1301 = vld [vmem:[%s3 + $0x24] sm:$0xf]
        %v1302 = vld [vmem:[%s3 + $0x28] sm:$0xf]
        %v1303 = vld [vmem:[%s3 + $0x2c] sm:$0xf]
        %v1304 = vld [vmem:[%s3 + $0x30] sm:$0xf]
        %v1305 = vld [vmem:[%s3 + $0x34] sm:$0xf]
        %v1306 = vld [vmem:[%s3 + $0x38] sm:$0xf]
        %v1307 = vld [vmem:[%s3 + $0x3c] sm:$0xf]
        %v1308 = vld [vmem:[%s3 + $0x40] sm:$0xf]
        %v1309 = vld [vmem:[%s3 + $0x44] sm:$0xf]
        %v1310 = vld [vmem:[%s3 + $0x48] sm:$0xf]
        %v1311 = vld [vmem:[%s3 + $0x4c] sm:$0xf]
        %v1312 = vld [vmem:[%s3 + $0x50] sm:$0xf]
        %v1313 = vld [vmem:[%s3 + $0x54] sm:$0xf]
        %v1314 = vld [vmem:[%s3 + $0x58] sm:$0xf]
        %v1315 = vld [vmem:[%s3 + $0x5c] sm:$0xf]
        %v1316 = vld [vmem:[%s3 + $0x60] sm:$0xf]
        %v1317 = vld [vmem:[%s3 + $0x64] sm:$0xf]
        %v1318 = vld [vmem:[%s3 + $0x68] sm:$0xf]
        %v1319 = vld [vmem:[%s3 + $0x6c] sm:$0xf]
        %v1320 = vld [vmem:[%s3 + $0x70] sm:$0xf]
        %v1321 = vld [vmem:[%s3 + $0x74] sm:$0xf]
        %v1322 = vld [vmem:[%s3 + $0x78] sm:$0xf]
        %v1323 = vld [vmem:[%s3 + $0x7c] sm:$0xf]
        %v1324 = vld [vmem:[%s4] sm:$0x1]
        %v1326 = vlaneseq
        %v1327 = vshrl.u32 %v1326, 7
        %v1328 = vsub.s32 0, %v1327
        %v1329 = vrot.slane %v1324, %v1328
        %v1363 = vunpack.c.l.b16 %v1292
        %v1364 = vunpack.c.l.b16 %v1293
        %v1365 = vunpack.c.l.b16 %v1294
        %v1366 = vunpack.c.l.b16 %v1295
        %v1367 = vunpack.c.l.b16 %v1296
        %v1368 = vunpack.c.l.b16 %v1297
        %v1369 = vunpack.c.l.b16 %v1298
        %v1370 = vunpack.c.l.b16 %v1299
        %v1371 = vunpack.c.l.b16 %v1300
        %v1372 = vunpack.c.l.b16 %v1301
        %v1373 = vunpack.c.l.b16 %v1302
        %v1374 = vunpack.c.l.b16 %v1303
        %v1375 = vunpack.c.l.b16 %v1304
        %v1376 = vunpack.c.l.b16 %v1305
        %v1377 = vunpack.c.l.b16 %v1306
        %v1378 = vunpack.c.l.b16 %v1307
        %v1379 = vunpack.c.l.b16 %v1308
        %v1380 = vunpack.c.l.b16 %v1309
        %v1381 = vunpack.c.l.b16 %v1310
        %v1382 = vunpack.c.l.b16 %v1311
        %v1383 = vunpack.c.l.b16 %v1312
        %v1384 = vunpack.c.l.b16 %v1313
        %v1385 = vunpack.c.l.b16 %v1314
        %v1386 = vunpack.c.l.b16 %v1315
        %v1387 = vunpack.c.l.b16 %v1316
        %v1388 = vunpack.c.l.b16 %v1317
        %v1389 = vunpack.c.l.b16 %v1318
        %v1390 = vunpack.c.l.b16 %v1319
        %v1391 = vunpack.c.l.b16 %v1320
        %v1392 = vunpack.c.l.b16 %v1321
        %v1393 = vunpack.c.l.b16 %v1322
        %v1394 = vunpack.c.l.b16 %v1323
        %v1395 = vpack.c.b16 %v1364, %v1363
        %v1396 = vpack.c.b16 %v1366, %v1365
        %v1397 = vpack.c.b16 %v1368, %v1367
        %v1398 = vpack.c.b16 %v1370, %v1369
        %v1399 = vpack.c.b16 %v1372, %v1371
        %v1400 = vpack.c.b16 %v1374, %v1373
        %v1401 = vpack.c.b16 %v1376, %v1375
        %v1402 = vpack.c.b16 %v1378, %v1377
        %v1403 = vpack.c.b16 %v1380, %v1379
        %v1404 = vpack.c.b16 %v1382, %v1381
        %v1405 = vpack.c.b16 %v1384, %v1383
        %v1406 = vpack.c.b16 %v1386, %v1385
        %v1407 = vpack.c.b16 %v1388, %v1387
        %v1408 = vpack.c.b16 %v1390, %v1389
        %v1409 = vpack.c.b16 %v1392, %v1391
        %v1410 = vpack.c.b16 %v1394, %v1393
        %1427 = vmatprep.subr.bf16.mxu0 0
        %1428 = vmatpush1.bf16.msra.mxu0 %v1395
        %1429 = vmatprep.subr.bf16.mxu0 0
        %1430 = vmatpush1.bf16.msra.mxu0 %v1396
        %1431 = vmatprep.subr.bf16.mxu0 0
        %1432 = vmatpush1.bf16.msra.mxu0 %v1397
        %1433 = vmatprep.subr.bf16.mxu0 0
        %1434 = vmatpush1.bf16.msra.mxu0 %v1398
        %1435 = vmatprep.subr.bf16.mxu0 0
        %1436 = vmatpush1.bf16.msra.mxu0 %v1399
        %1437 = vmatprep.subr.bf16.mxu0 0
        %1438 = vmatpush1.bf16.msra.mxu0 %v1400
        %1439 = vmatprep.subr.bf16.mxu0 0
        %1440 = vmatpush1.bf16.msra.mxu0 %v1401
        %1441 = vmatprep.subr.bf16.mxu0 0
        %1442 = vmatpush1.bf16.msra.mxu0 %v1402
        %1443 = vmatprep.subr.bf16.mxu0 0
        %1444 = vmatpush1.bf16.msra.mxu0 %v1403
        %1445 = vmatprep.subr.bf16.mxu0 0
        %1446 = vmatpush1.bf16.msra.mxu0 %v1404
        %1447 = vmatprep.subr.bf16.mxu0 0
        %1448 = vmatpush1.bf16.msra.mxu0 %v1405
        %1449 = vmatprep.subr.bf16.mxu0 0
        %1450 = vmatpush1.bf16.msra.mxu0 %v1406
        %1451 = vmatprep.subr.bf16.mxu0 0
        %1452 = vmatpush1.bf16.msra.mxu0 %v1407
        %1453 = vmatprep.subr.bf16.mxu0 0
        %1454 = vmatpush1.bf16.msra.mxu0 %v1408
        %1455 = vmatprep.subr.bf16.mxu0 0
        %1456 = vmatpush1.bf16.msra.mxu0 %v1409
        %1457 = vmatprep.subr.bf16.mxu0 0
        %1458 = vmatpush1.bf16.msra.mxu0 %v1410
        %1459 = vmatprep.mubr.bf16.mxu0 %v1291
        %1460 = vmatmul.mubr.bf16.gmra.mrb[0].mxu0 %v1290
        %v1461 = vpop.f32.mrb[0].mxu0
        %v1462 = vadd.f32 %v1329, %v1461
        %v1463 = vpop.f32.mrb[0].mxu0
        %v1464 = vpop.f32.mrb[0].mxu0
        %v1465 = vpop.f32.mrb[0].mxu0
        %1466 = vdwg.mxu0
        %1467 = vst [vmem:[%s232] sm:$0xff] %v1462
        %s1468 = sand.u32 %s138, 1
        %s1469 = scalar_lea.sflag [#allocation4], %s1468
        %s1470 = sand.u32 %s138, 1
        %s1471 = smul.addr %s1470, 8
        %s1472 = scalar_lea.vmem [#allocation5], %s1471
        // Predicated region
        $region45: #{tpu_custom_call.1} parent=39 // pred_check
          %p1473 = pneg %p148
        $region46: #{tpu_custom_call.1} parent=39 // pred_check_branch
          %1475 = sbr.rel (%p1473) target = $region48
        $region47: #{tpu_custom_call.1} parent=39 // pred_region
          %s1477 = ssub.s32 128, 128
          %1478 = vsyncadd %s1469, %s1477
          %s1479 = smul.addr %s20, 128
          %s1480 = scalar_lea.hbm %s5, %s1479
          %s1482 = sshll.u32 %s1472, 4
          %s1483 = int_to_ptr.vmem [resolvable:$true] %s1482
          %1485 = dma.vmem_to_hbm [thread:$0]  %s1483, 128, %s1480, %s1469
        $region48: #{tpu_custom_call.1} parent=39 // pred_fallthru
          _
      $region40: #{tpu_custom_call.1} parent=5 // pred_fallthru
        _
      %p1486 = scmp.le.s32.totalorder 2, %s15
      // Predicated region
      $region49: #{tpu_custom_call.1} parent=5 // pred_check
        %p1487 = pneg %p1486
      $region50: #{tpu_custom_call.1} parent=5 // pred_check_branch
        %1489 = sbr.rel (%p1487) target = $region52
      $region51: #{tpu_custom_call.1} parent=5 // pred_region
        %s1490 = ssub.s32 %s15, 2
        // Predicated region
        $region53: #{tpu_custom_call.1} parent=51 // pred_check
          %p1491 = pneg %p154
        $region54: #{tpu_custom_call.1} parent=51 // pred_check_branch
          %1493 = sbr.rel (%p1491) target = $region56
        $region55: #{tpu_custom_call.1} parent=51 // pred_region
          %s1494 = sand.u32 %s139, 1
          %s1495 = scalar_lea.sflag [#allocation4], %s1494
          %s1496 = sand.u32 %s139, 1
          %s1497 = smul.addr %s1496, 8
          %s1498 = scalar_lea.vmem [#allocation5], %s1497
          %1499 = dma.done %s1495, 128
        $region56: #{tpu_custom_call.1} parent=51 // pred_fallthru
          _
      $region52: #{tpu_custom_call.1} parent=5 // pred_fallthru
        _
    $region6: #{tpu_custom_call.1} parent=1 // loop_footer
      %s19 = sadd.s32 1, %s15
    $region7: #{tpu_custom_call.1} parent=1 // loop_footer_branch
      %14 = sbr.rel target = $region3
    $region8: #{tpu_custom_call.1} parent=1 // loop_exit
      _
    %1500 = vsyncpa [#allocation3], 1
    %s1501 = scalar_lea.sflag [#allocation3], 1
    %1502 = vsyncpa %s1501, 1
    %1503 = vsyncpa [#allocation4], 1
    %s1504 = scalar_lea.sflag [#allocation4], 1
    %1505 = vsyncpa %s1504, 1

</llo_original>
